<compile_context>
chip_gen: v7x
topology: tpu7x:2x2x1
jax: 0.10.0
libtpu: 0.0.40
codegen_flags: <defaults>
</compile_context>

<pallas_src>
import functools

import numpy as np

import jax
import jax.numpy as jnp
from jax.experimental import pallas as pl
from jax.experimental.pallas import tpu as pltpu

EPS = 1e-5


def basic_block_kernel(x_ref, m_ref, w1_ref, g1_ref, b1_ref, w2_ref, g2_ref,
                       b2_ref, out_ref, xc_ref, p_ref, *, n, c, h, w):
    # x_ref  : (N*C, H*W)  f32   NCHW-flat input
    # m_ref  : (9, 1, N*H*W) f32 halo masks (1 inside image, 0 on padding)
    # w1_ref/w2_ref: (C, 9*C) bf16 im2col-folded conv weights
    # g*/b*  : (C, 1) f32   BN affine params
    # out_ref: (N*C, H*W)   NCHW-flat output
    # xc_ref : (C, N*H*W) f32 scratch — channel-major x (also the residual)
    # p_ref  : (9*C, N*H*W) f32 scratch — shared im2col buffer (both convs)
    hw = h * w
    L = n * hw
    inv_m = 1.0 / float(L)

    # NCHW-flat (N*C, HW) -> channel-major (C, N*HW); reused as f32 identity.
    for bi in range(n):
        xc_ref[:, bi * hw:(bi + 1) * hw] = (
            x_ref[bi * c:(bi + 1) * c, :].astype(jnp.float32))

    def build_im2col(src):
        # src: (C, L) f32. Fill p_ref with the 9 halo-masked shifted taps.
        t = 0
        for oy in (-1, 0, 1):
            for ox in (-1, 0, 1):
                s = oy * w + ox          # lane shift for this tap
                if s == 0:
                    shifted = src
                elif s > 0:
                    shifted = jnp.concatenate(
                        [src[:, s:], jnp.zeros((c, s), jnp.float32)], axis=1)
                else:
                    shifted = jnp.concatenate(
                        [jnp.zeros((c, -s), jnp.float32), src[:, :L + s]],
                        axis=1)
                # mask kills every out-of-image (padding) contribution
                p_ref[t * c:(t + 1) * c, :] = shifted * m_ref[t]
                t += 1

    def conv3x3(wt_ref):
        # Single fused MXU matmul per conv: (C, 9C) @ (9C, N*HW), bf16 in,
        # f32 accumulation.
        return jnp.dot(wt_ref[...], p_ref[...].astype(jnp.bfloat16),
                       preferred_element_type=jnp.float32)

    def bn(acc, g_ref, b_ref):
        # Training-mode batch stats, fused single pass: var = E[x^2] - mean^2.
        ssum = jnp.sum(acc, axis=1, keepdims=True)            # (C, 1)
        ssq = jnp.sum(acc * acc, axis=1, keepdims=True)       # (C, 1)
        mean = ssum * inv_m
        var = ssq * inv_m - mean * mean
        scale = jax.lax.rsqrt(var + EPS) * g_ref[...]
        return (acc - mean) * scale + b_ref[...]

    # ---- conv1 -> bn1 -> relu ----
    build_im2col(xc_ref[...])
    y1 = jnp.maximum(bn(conv3x3(w1_ref), g1_ref, b1_ref), 0.0)

    # ---- conv2 -> bn2 ----
    build_im2col(y1)
    y2 = bn(conv3x3(w2_ref), g2_ref, b2_ref)

    # ---- residual add (f32 identity) + relu, lane-dense stores ----
    out = jnp.maximum(y2 + xc_ref[...], 0.0)
    for bi in range(n):
        out_ref[bi * c:(bi + 1) * c, :] = (
            out[:, bi * hw:(bi + 1) * hw].astype(out_ref.dtype))


@jax.jit
def basic_block(x_nchw, w1, g1, b1, w2, g2, b2):
    """x_nchw: (N, C, H, W) f32; w1/w2: (C, C, 3, 3) PyTorch conv weights."""
    N, C, H, W = x_nchw.shape
    assert w1.shape[0] == C, "stride=1 / downsample=None path requires Cin == Cout"
    HW = H * W
    L = N * HW

    # NCHW is contiguous -> free reshape (no transpose, no pad).
    x_flat = x_nchw.reshape(N * C, HW)

    # (Cout, Cin, kh, kw) -> (Cout, kh, kw, Cin) -> (Cout, 9*Cin); bf16 for MXU.
    w1t = jnp.transpose(w1, (0, 2, 3, 1)).reshape(C, 9 * C).astype(jnp.bfloat16)
    w2t = jnp.transpose(w2, (0, 2, 3, 1)).reshape(C, 9 * C).astype(jnp.bfloat16)

    # Halo masks for the 9 taps, computed host-side from static shapes.
    ii, jj = np.meshgrid(np.arange(H), np.arange(W), indexing="ij")
    masks = []
    for oy in (-1, 0, 1):
        for ox in (-1, 0, 1):
            valid = ((ii + oy >= 0) & (ii + oy < H) &
                     (jj + ox >= 0) & (jj + ox < W))
            masks.append(np.tile(valid.reshape(-1), N))
    mask_arr = jnp.asarray(
        np.stack(masks).astype(np.float32).reshape(9, 1, L))

    kernel = functools.partial(basic_block_kernel, n=N, c=C, h=H, w=W)

    out_flat = pl.pallas_call(
        kernel,
        out_shape=jax.ShapeDtypeStruct((N * C, HW), x_nchw.dtype),
        in_specs=[pl.BlockSpec(memory_space=pltpu.MemorySpace.VMEM)] * 8,
        out_specs=pl.BlockSpec(memory_space=pltpu.MemorySpace.VMEM),
        scratch_shapes=[
            pltpu.VMEM((C, L), jnp.float32),       # channel-major x / residual
            pltpu.VMEM((9 * C, L), jnp.float32),   # shared im2col buffer
        ],
        # Explicit VMEM budget (kept well under v7x's 64 MiB per TensorCore).
        compiler_params=pltpu.CompilerParams(
            vmem_limit_bytes=48 * 1024 * 1024),
    )(x_flat, mask_arr, w1t,
      g1.reshape(C, 1).astype(jnp.float32), b1.reshape(C, 1).astype(jnp.float32),
      w2t,
      g2.reshape(C, 1).astype(jnp.float32), b2.reshape(C, 1).astype(jnp.float32))

    return out_flat.reshape(N, C, H, W)


def basic_block_reference(x_nchw, w1, g1, b1, w2, g2, b2):
    """Pure-JAX reference (lax conv, NCHW), training-mode BN, all f32."""
    def conv(x, w):
        return jax.lax.conv_general_dilated(
            x, w, window_strides=(1, 1), padding=((1, 1), (1, 1)),
            dimension_numbers=("NCHW", "OIHW", "NCHW"))

    def bn(x, g, b):
        m = jnp.mean(x, axis=(0, 2, 3), keepdims=True)
        v = jnp.mean((x - m) ** 2, axis=(0, 2, 3), keepdims=True)
        return (x - m) * jax.lax.rsqrt(v + EPS) * g.reshape(1, -1, 1, 1) \
               + b.reshape(1, -1, 1, 1)

    out = jax.nn.relu(bn(conv(x_nchw, w1), g1, b1))
    out = bn(conv(out, w2), g2, b2)
    return jax.nn.relu(out + x_nchw)


if __name__ == "__main__":
    N, C, H, W = 2, 8, 16, 16
    key = jax.random.PRNGKey(0)
    kx, k1, k2, kg1, kb1, kg2, kb2 = jax.random.split(key, 7)

    x = jax.random.normal(kx, (N, C, H, W), jnp.float32)
    w1 = jax.random.normal(k1, (C, C, 3, 3), jnp.float32) * 0.1
    w2 = jax.random.normal(k2, (C, C, 3, 3), jnp.float32) * 0.1
    g1 = 1.0 + 0.1 * jax.random.normal(kg1, (C,), jnp.float32)
    b1 = 0.1 * jax.random.normal(kb1, (C,), jnp.float32)
    g2 = 1.0 + 0.1 * jax.random.normal(kg2, (C,), jnp.float32)
    b2 = 0.1 * jax.random.normal(kb2, (C,), jnp.float32)

    out = basic_block(x, w1, g1, b1, w2, g2, b2)
    out = jax.block_until_ready(out)

    ref = basic_block_reference(x, w1, g1, b1, w2, g2, b2)
    assert out.shape == (N, C, H, W)
    # Matmul operands are bf16 (per perf feedback); compare against the f32
    # reference with a correspondingly looser (but still tight) tolerance.
    err = float(jnp.max(jnp.abs(out - ref)))
    assert err < 5e-2, f"mismatch vs JAX reference: max abs err = {err}"

    print("KERNEL_OK")
</pallas_src>

<mosaic_0001>
module attributes {stable_mosaic.version = 11 : i64} {
  func.func @basic_block_kernel(%arg0: memref<16x256xf32, #tpu.memory_space<vmem>>, %arg1: memref<9x1x512xf32, #tpu.memory_space<vmem>>, %arg2: memref<8x72xbf16, #tpu.memory_space<vmem>>, %arg3: memref<8x1xf32, #tpu.memory_space<vmem>>, %arg4: memref<8x1xf32, #tpu.memory_space<vmem>>, %arg5: memref<8x72xbf16, #tpu.memory_space<vmem>>, %arg6: memref<8x1xf32, #tpu.memory_space<vmem>>, %arg7: memref<8x1xf32, #tpu.memory_space<vmem>>, %arg8: memref<16x256xf32, #tpu.memory_space<vmem>>, %arg9: memref<8x512xf32, #tpu.memory_space<vmem>>, %arg10: memref<72x512xf32, #tpu.memory_space<vmem>>) attributes {dimension_semantics = [], scalar_prefetch = 0 : i64, scratch_operands = 2 : i64, tpu.core_type = #tpu.core_type<tc>} {
    %c0 = arith.constant 0 : index
    %c0_0 = arith.constant 0 : index
    %0 = vector.load %arg0[%c0, %c0_0] : memref<16x256xf32, #tpu.memory_space<vmem>>, vector<8x256xf32>
    %c0_1 = arith.constant 0 : index
    %c0_2 = arith.constant 0 : index
    %1 = vector.load %arg9[%c0_1, %c0_2] : memref<8x512xf32, #tpu.memory_space<vmem>>, vector<8x256xf32>
    tpu.vector_store %arg9[%c0_1, %c0_2], %0 {strides = array<i32>} : memref<8x512xf32, #tpu.memory_space<vmem>>, vector<8x256xf32>,
    %c8 = arith.constant 8 : index
    %c0_3 = arith.constant 0 : index
    %2 = vector.load %arg0[%c8, %c0_3] : memref<16x256xf32, #tpu.memory_space<vmem>>, vector<8x256xf32>
    %c0_4 = arith.constant 0 : index
    %c256 = arith.constant 256 : index
    %3 = vector.load %arg9[%c0_4, %c256] : memref<8x512xf32, #tpu.memory_space<vmem>>, vector<8x256xf32>
    tpu.vector_store %arg9[%c0_4, %c256], %2 {strides = array<i32>} : memref<8x512xf32, #tpu.memory_space<vmem>>, vector<8x256xf32>,
    %c0_5 = arith.constant 0 : index
    %c0_6 = arith.constant 0 : index
    %4 = vector.load %arg9[%c0_5, %c0_6] : memref<8x512xf32, #tpu.memory_space<vmem>>, vector<8x512xf32>
    %cst = arith.constant 0.000000e+00 : f32
    %5 = vector.broadcast %cst : f32 to vector<8x17xf32>
    %6 = vector.extract_strided_slice %4 {offsets = [0, 0], sizes = [8, 495], strides = [1, 1]} : vector<8x512xf32> to vector<8x495xf32>
    %7 = tpu.concatenate %5, %6 in 1 : vector<8x17xf32>, vector<8x495xf32> -> vector<8x512xf32>
    %c0_7 = arith.constant 0 : index
    %c0_8 = arith.constant 0 : index
    %c0_9 = arith.constant 0 : index
    %8 = vector.load %arg1[%c0_7, %c0_8, %c0_9] : memref<9x1x512xf32, #tpu.memory_space<vmem>>, vector<1x1x512xf32>
    %9 = vector.shape_cast %8 : vector<1x1x512xf32> to vector<1x512xf32>
    %10 = vector.broadcast %9 : vector<1x512xf32> to vector<8x512xf32>
    %11 = arith.mulf %7, %10 : vector<8x512xf32>
    %c0_10 = arith.constant 0 : index
    %c0_11 = arith.constant 0 : index
    %12 = vector.load %arg10[%c0_10, %c0_11] : memref<72x512xf32, #tpu.memory_space<vmem>>, vector<8x512xf32>
    tpu.vector_store %arg10[%c0_10, %c0_11], %11 {strides = array<i32>} : memref<72x512xf32, #tpu.memory_space<vmem>>, vector<8x512xf32>,
    %cst_12 = arith.constant 0.000000e+00 : f32
    %13 = vector.broadcast %cst_12 : f32 to vector<8x16xf32>
    %14 = vector.extract_strided_slice %4 {offsets = [0, 0], sizes = [8, 496], strides = [1, 1]} : vector<8x512xf32> to vector<8x496xf32>
    %15 = tpu.concatenate %13, %14 in 1 : vector<8x16xf32>, vector<8x496xf32> -> vector<8x512xf32>
    %c1 = arith.constant 1 : index
    %c0_13 = arith.constant 0 : index
    %c0_14 = arith.constant 0 : index
    %16 = vector.load %arg1[%c1, %c0_13, %c0_14] : memref<9x1x512xf32, #tpu.memory_space<vmem>>, vector<1x1x512xf32>
    %17 = vector.shape_cast %16 : vector<1x1x512xf32> to vector<1x512xf32>
    %18 = vector.broadcast %17 : vector<1x512xf32> to vector<8x512xf32>
    %19 = arith.mulf %15, %18 : vector<8x512xf32>
    %c8_15 = arith.constant 8 : index
    %c0_16 = arith.constant 0 : index
    %20 = vector.load %arg10[%c8_15, %c0_16] : memref<72x512xf32, #tpu.memory_space<vmem>>, vector<8x512xf32>
    tpu.vector_store %arg10[%c8_15, %c0_16], %19 {strides = array<i32>} : memref<72x512xf32, #tpu.memory_space<vmem>>, vector<8x512xf32>,
    %cst_17 = arith.constant 0.000000e+00 : f32
    %21 = vector.broadcast %cst_17 : f32 to vector<8x15xf32>
    %22 = vector.extract_strided_slice %4 {offsets = [0, 0], sizes = [8, 497], strides = [1, 1]} : vector<8x512xf32> to vector<8x497xf32>
    %23 = tpu.concatenate %21, %22 in 1 : vector<8x15xf32>, vector<8x497xf32> -> vector<8x512xf32>
    %c2 = arith.constant 2 : index
    %c0_18 = arith.constant 0 : index
    %c0_19 = arith.constant 0 : index
    %24 = vector.load %arg1[%c2, %c0_18, %c0_19] : memref<9x1x512xf32, #tpu.memory_space<vmem>>, vector<1x1x512xf32>
    %25 = vector.shape_cast %24 : vector<1x1x512xf32> to vector<1x512xf32>
    %26 = vector.broadcast %25 : vector<1x512xf32> to vector<8x512xf32>
    %27 = arith.mulf %23, %26 : vector<8x512xf32>
    %c16 = arith.constant 16 : index
    %c0_20 = arith.constant 0 : index
    %28 = vector.load %arg10[%c16, %c0_20] : memref<72x512xf32, #tpu.memory_space<vmem>>, vector<8x512xf32>
    tpu.vector_store %arg10[%c16, %c0_20], %27 {strides = array<i32>} : memref<72x512xf32, #tpu.memory_space<vmem>>, vector<8x512xf32>,
    %cst_21 = arith.constant 0.000000e+00 : f32
    %29 = vector.broadcast %cst_21 : f32 to vector<8x1xf32>
    %30 = vector.extract_strided_slice %4 {offsets = [0, 0], sizes = [8, 511], strides = [1, 1]} : vector<8x512xf32> to vector<8x511xf32>
    %31 = tpu.concatenate %29, %30 in 1 : vector<8x1xf32>, vector<8x511xf32> -> vector<8x512xf32>
    %c3 = arith.constant 3 : index
    %c0_22 = arith.constant 0 : index
    %c0_23 = arith.constant 0 : index
    %32 = vector.load %arg1[%c3, %c0_22, %c0_23] : memref<9x1x512xf32, #tpu.memory_space<vmem>>, vector<1x1x512xf32>
    %33 = vector.shape_cast %32 : vector<1x1x512xf32> to vector<1x512xf32>
    %34 = vector.broadcast %33 : vector<1x512xf32> to vector<8x512xf32>
    %35 = arith.mulf %31, %34 : vector<8x512xf32>
    %c24 = arith.constant 24 : index
    %c0_24 = arith.constant 0 : index
    %36 = vector.load %arg10[%c24, %c0_24] : memref<72x512xf32, #tpu.memory_space<vmem>>, vector<8x512xf32>
    tpu.vector_store %arg10[%c24, %c0_24], %35 {strides = array<i32>} : memref<72x512xf32, #tpu.memory_space<vmem>>, vector<8x512xf32>,
    %c4 = arith.constant 4 : index
    %c0_25 = arith.constant 0 : index
    %c0_26 = arith.constant 0 : index
    %37 = vector.load %arg1[%c4, %c0_25, %c0_26] : memref<9x1x512xf32, #tpu.memory_space<vmem>>, vector<1x1x512xf32>
    %38 = vector.shape_cast %37 : vector<1x1x512xf32> to vector<1x512xf32>
    %39 = vector.broadcast %38 : vector<1x512xf32> to vector<8x512xf32>
    %40 = arith.mulf %4, %39 : vector<8x512xf32>
    %c32 = arith.constant 32 : index
    %c0_27 = arith.constant 0 : index
    %41 = vector.load %arg10[%c32, %c0_27] : memref<72x512xf32, #tpu.memory_space<vmem>>, vector<8x512xf32>
    tpu.vector_store %arg10[%c32, %c0_27], %40 {strides = array<i32>} : memref<72x512xf32, #tpu.memory_space<vmem>>, vector<8x512xf32>,
    %42 = vector.extract_strided_slice %4 {offsets = [0, 1], sizes = [8, 511], strides = [1, 1]} : vector<8x512xf32> to vector<8x511xf32>
    %cst_28 = arith.constant 0.000000e+00 : f32
    %43 = vector.broadcast %cst_28 : f32 to vector<8x1xf32>
    %44 = tpu.concatenate %42, %43 in 1 : vector<8x511xf32>, vector<8x1xf32> -> vector<8x512xf32>
    %c5 = arith.constant 5 : index
    %c0_29 = arith.constant 0 : index
    %c0_30 = arith.constant 0 : index
    %45 = vector.load %arg1[%c5, %c0_29, %c0_30] : memref<9x1x512xf32, #tpu.memory_space<vmem>>, vector<1x1x512xf32>
    %46 = vector.shape_cast %45 : vector<1x1x512xf32> to vector<1x512xf32>
    %47 = vector.broadcast %46 : vector<1x512xf32> to vector<8x512xf32>
    %48 = arith.mulf %44, %47 : vector<8x512xf32>
    %c40 = arith.constant 40 : index
    %c0_31 = arith.constant 0 : index
    %49 = vector.load %arg10[%c40, %c0_31] : memref<72x512xf32, #tpu.memory_space<vmem>>, vector<8x512xf32>
    tpu.vector_store %arg10[%c40, %c0_31], %48 {strides = array<i32>} : memref<72x512xf32, #tpu.memory_space<vmem>>, vector<8x512xf32>,
    %50 = vector.extract_strided_slice %4 {offsets = [0, 15], sizes = [8, 497], strides = [1, 1]} : vector<8x512xf32> to vector<8x497xf32>
    %cst_32 = arith.constant 0.000000e+00 : f32
    %51 = vector.broadcast %cst_32 : f32 to vector<8x15xf32>
    %52 = tpu.concatenate %50, %51 in 1 : vector<8x497xf32>, vector<8x15xf32> -> vector<8x512xf32>
    %c6 = arith.constant 6 : index
    %c0_33 = arith.constant 0 : index
    %c0_34 = arith.constant 0 : index
    %53 = vector.load %arg1[%c6, %c0_33, %c0_34] : memref<9x1x512xf32, #tpu.memory_space<vmem>>, vector<1x1x512xf32>
    %54 = vector.shape_cast %53 : vector<1x1x512xf32> to vector<1x512xf32>
    %55 = vector.broadcast %54 : vector<1x512xf32> to vector<8x512xf32>
    %56 = arith.mulf %52, %55 : vector<8x512xf32>
    %c48 = arith.constant 48 : index
    %c0_35 = arith.constant 0 : index
    %57 = vector.load %arg10[%c48, %c0_35] : memref<72x512xf32, #tpu.memory_space<vmem>>, vector<8x512xf32>
    tpu.vector_store %arg10[%c48, %c0_35], %56 {strides = array<i32>} : memref<72x512xf32, #tpu.memory_space<vmem>>, vector<8x512xf32>,
    %58 = vector.extract_strided_slice %4 {offsets = [0, 16], sizes = [8, 496], strides = [1, 1]} : vector<8x512xf32> to vector<8x496xf32>
    %cst_36 = arith.constant 0.000000e+00 : f32
    %59 = vector.broadcast %cst_36 : f32 to vector<8x16xf32>
    %60 = tpu.concatenate %58, %59 in 1 : vector<8x496xf32>, vector<8x16xf32> -> vector<8x512xf32>
    %c7 = arith.constant 7 : index
    %c0_37 = arith.constant 0 : index
    %c0_38 = arith.constant 0 : index
    %61 = vector.load %arg1[%c7, %c0_37, %c0_38] : memref<9x1x512xf32, #tpu.memory_space<vmem>>, vector<1x1x512xf32>
    %62 = vector.shape_cast %61 : vector<1x1x512xf32> to vector<1x512xf32>
    %63 = vector.broadcast %62 : vector<1x512xf32> to vector<8x512xf32>
    %64 = arith.mulf %60, %63 : vector<8x512xf32>
    %c56 = arith.constant 56 : index
    %c0_39 = arith.constant 0 : index
    %65 = vector.load %arg10[%c56, %c0_39] : memref<72x512xf32, #tpu.memory_space<vmem>>, vector<8x512xf32>
    tpu.vector_store %arg10[%c56, %c0_39], %64 {strides = array<i32>} : memref<72x512xf32, #tpu.memory_space<vmem>>, vector<8x512xf32>,
    %66 = vector.extract_strided_slice %4 {offsets = [0, 17], sizes = [8, 495], strides = [1, 1]} : vector<8x512xf32> to vector<8x495xf32>
    %cst_40 = arith.constant 0.000000e+00 : f32
    %67 = vector.broadcast %cst_40 : f32 to vector<8x17xf32>
    %68 = tpu.concatenate %66, %67 in 1 : vector<8x495xf32>, vector<8x17xf32> -> vector<8x512xf32>
    %c8_41 = arith.constant 8 : index
    %c0_42 = arith.constant 0 : index
    %c0_43 = arith.constant 0 : index
    %69 = vector.load %arg1[%c8_41, %c0_42, %c0_43] : memref<9x1x512xf32, #tpu.memory_space<vmem>>, vector<1x1x512xf32>
    %70 = vector.shape_cast %69 : vector<1x1x512xf32> to vector<1x512xf32>
    %71 = vector.broadcast %70 : vector<1x512xf32> to vector<8x512xf32>
    %72 = arith.mulf %68, %71 : vector<8x512xf32>
    %c64 = arith.constant 64 : index
    %c0_44 = arith.constant 0 : index
    %73 = vector.load %arg10[%c64, %c0_44] : memref<72x512xf32, #tpu.memory_space<vmem>>, vector<8x512xf32>
    tpu.vector_store %arg10[%c64, %c0_44], %72 {strides = array<i32>} : memref<72x512xf32, #tpu.memory_space<vmem>>, vector<8x512xf32>,
    %c0_45 = arith.constant 0 : index
    %c0_46 = arith.constant 0 : index
    %74 = vector.load %arg2[%c0_45, %c0_46] : memref<8x72xbf16, #tpu.memory_space<vmem>>, vector<8x72xbf16>
    %c0_47 = arith.constant 0 : index
    %c0_48 = arith.constant 0 : index
    %75 = vector.load %arg10[%c0_47, %c0_48] : memref<72x512xf32, #tpu.memory_space<vmem>>, vector<72x512xf32>
    %76 = arith.truncf %75 : vector<72x512xf32> to vector<72x512xbf16>
    %cst_49 = arith.constant dense<0.000000e+00> : vector<8x512xf32>
    %77 = tpu.matmul %74, %76, %cst_49 {dimension_numbers = #tpu.dot_dimension_numbers<[1], [0], [0], [1], [0, 0, 1, 1], [], []>} : vector<8x72xbf16>, vector<72x512xbf16>, vector<8x512xf32> -> vector<8x512xf32>
    %cst_50 = arith.constant dense<0.000000e+00> : vector<8xf32>
    %78 = vector.multi_reduction <add>, %77, %cst_50 [1] : vector<8x512xf32> to vector<8xf32>
    %79 = vector.shape_cast %78 : vector<8xf32> to vector<8x1xf32>
    %80 = arith.mulf %77, %77 : vector<8x512xf32>
    %cst_51 = arith.constant dense<0.000000e+00> : vector<8xf32>
    %81 = vector.multi_reduction <add>, %80, %cst_51 [1] : vector<8x512xf32> to vector<8xf32>
    %82 = vector.shape_cast %81 : vector<8xf32> to vector<8x1xf32>
    %cst_52 = arith.constant 0.001953125 : f32
    %83 = vector.broadcast %cst_52 : f32 to vector<8x1xf32>
    %84 = arith.mulf %79, %83 : vector<8x1xf32>
    %cst_53 = arith.constant 0.001953125 : f32
    %85 = vector.broadcast %cst_53 : f32 to vector<8x1xf32>
    %86 = arith.mulf %82, %85 : vector<8x1xf32>
    %87 = arith.mulf %84, %84 : vector<8x1xf32>
    %88 = arith.subf %86, %87 : vector<8x1xf32>
    %cst_54 = arith.constant 9.99999974E-6 : f32
    %89 = vector.broadcast %cst_54 : f32 to vector<8x1xf32>
    %90 = arith.addf %88, %89 : vector<8x1xf32>
    %91 = math.rsqrt %90 : vector<8x1xf32>
    %c0_55 = arith.constant 0 : index
    %c0_56 = arith.constant 0 : index
    %92 = vector.load %arg3[%c0_55, %c0_56] : memref<8x1xf32, #tpu.memory_space<vmem>>, vector<8x1xf32>
    %93 = arith.mulf %91, %92 : vector<8x1xf32>
    %94 = vector.broadcast %84 : vector<8x1xf32> to vector<8x512xf32>
    %95 = arith.subf %77, %94 : vector<8x512xf32>
    %96 = vector.broadcast %93 : vector<8x1xf32> to vector<8x512xf32>
    %97 = arith.mulf %95, %96 : vector<8x512xf32>
    %c0_57 = arith.constant 0 : index
    %c0_58 = arith.constant 0 : index
    %98 = vector.load %arg4[%c0_57, %c0_58] : memref<8x1xf32, #tpu.memory_space<vmem>>, vector<8x1xf32>
    %99 = vector.broadcast %98 : vector<8x1xf32> to vector<8x512xf32>
    %100 = arith.addf %97, %99 : vector<8x512xf32>
    %cst_59 = arith.constant 0.000000e+00 : f32
    %101 = vector.broadcast %cst_59 : f32 to vector<8x512xf32>
    %102 = arith.maximumf %100, %101 : vector<8x512xf32>
    %cst_60 = arith.constant 0.000000e+00 : f32
    %103 = vector.broadcast %cst_60 : f32 to vector<8x17xf32>
    %104 = vector.extract_strided_slice %102 {offsets = [0, 0], sizes = [8, 495], strides = [1, 1]} : vector<8x512xf32> to vector<8x495xf32>
    %105 = tpu.concatenate %103, %104 in 1 : vector<8x17xf32>, vector<8x495xf32> -> vector<8x512xf32>
    %c0_61 = arith.constant 0 : index
    %c0_62 = arith.constant 0 : index
    %c0_63 = arith.constant 0 : index
    %106 = vector.load %arg1[%c0_61, %c0_62, %c0_63] : memref<9x1x512xf32, #tpu.memory_space<vmem>>, vector<1x1x512xf32>
    %107 = vector.shape_cast %106 : vector<1x1x512xf32> to vector<1x512xf32>
    %108 = vector.broadcast %107 : vector<1x512xf32> to vector<8x512xf32>
    %109 = arith.mulf %105, %108 : vector<8x512xf32>
    %c0_64 = arith.constant 0 : index
    %c0_65 = arith.constant 0 : index
    %110 = vector.load %arg10[%c0_64, %c0_65] : memref<72x512xf32, #tpu.memory_space<vmem>>, vector<8x512xf32>
    tpu.vector_store %arg10[%c0_64, %c0_65], %109 {strides = array<i32>} : memref<72x512xf32, #tpu.memory_space<vmem>>, vector<8x512xf32>,
    %cst_66 = arith.constant 0.000000e+00 : f32
    %111 = vector.broadcast %cst_66 : f32 to vector<8x16xf32>
    %112 = vector.extract_strided_slice %102 {offsets = [0, 0], sizes = [8, 496], strides = [1, 1]} : vector<8x512xf32> to vector<8x496xf32>
    %113 = tpu.concatenate %111, %112 in 1 : vector<8x16xf32>, vector<8x496xf32> -> vector<8x512xf32>
    %c1_67 = arith.constant 1 : index
    %c0_68 = arith.constant 0 : index
    %c0_69 = arith.constant 0 : index
    %114 = vector.load %arg1[%c1_67, %c0_68, %c0_69] : memref<9x1x512xf32, #tpu.memory_space<vmem>>, vector<1x1x512xf32>
    %115 = vector.shape_cast %114 : vector<1x1x512xf32> to vector<1x512xf32>
    %116 = vector.broadcast %115 : vector<1x512xf32> to vector<8x512xf32>
    %117 = arith.mulf %113, %116 : vector<8x512xf32>
    %c8_70 = arith.constant 8 : index
    %c0_71 = arith.constant 0 : index
    %118 = vector.load %arg10[%c8_70, %c0_71] : memref<72x512xf32, #tpu.memory_space<vmem>>, vector<8x512xf32>
    tpu.vector_store %arg10[%c8_70, %c0_71], %117 {strides = array<i32>} : memref<72x512xf32, #tpu.memory_space<vmem>>, vector<8x512xf32>,
    %cst_72 = arith.constant 0.000000e+00 : f32
    %119 = vector.broadcast %cst_72 : f32 to vector<8x15xf32>
    %120 = vector.extract_strided_slice %102 {offsets = [0, 0], sizes = [8, 497], strides = [1, 1]} : vector<8x512xf32> to vector<8x497xf32>
    %121 = tpu.concatenate %119, %120 in 1 : vector<8x15xf32>, vector<8x497xf32> -> vector<8x512xf32>
    %c2_73 = arith.constant 2 : index
    %c0_74 = arith.constant 0 : index
    %c0_75 = arith.constant 0 : index
    %122 = vector.load %arg1[%c2_73, %c0_74, %c0_75] : memref<9x1x512xf32, #tpu.memory_space<vmem>>, vector<1x1x512xf32>
    %123 = vector.shape_cast %122 : vector<1x1x512xf32> to vector<1x512xf32>
    %124 = vector.broadcast %123 : vector<1x512xf32> to vector<8x512xf32>
    %125 = arith.mulf %121, %124 : vector<8x512xf32>
    %c16_76 = arith.constant 16 : index
    %c0_77 = arith.constant 0 : index
    %126 = vector.load %arg10[%c16_76, %c0_77] : memref<72x512xf32, #tpu.memory_space<vmem>>, vector<8x512xf32>
    tpu.vector_store %arg10[%c16_76, %c0_77], %125 {strides = array<i32>} : memref<72x512xf32, #tpu.memory_space<vmem>>, vector<8x512xf32>,
    %cst_78 = arith.constant 0.000000e+00 : f32
    %127 = vector.broadcast %cst_78 : f32 to vector<8x1xf32>
    %128 = vector.extract_strided_slice %102 {offsets = [0, 0], sizes = [8, 511], strides = [1, 1]} : vector<8x512xf32> to vector<8x511xf32>
    %129 = tpu.concatenate %127, %128 in 1 : vector<8x1xf32>, vector<8x511xf32> -> vector<8x512xf32>
    %c3_79 = arith.constant 3 : index
    %c0_80 = arith.constant 0 : index
    %c0_81 = arith.constant 0 : index
    %130 = vector.load %arg1[%c3_79, %c0_80, %c0_81] : memref<9x1x512xf32, #tpu.memory_space<vmem>>, vector<1x1x512xf32>
    %131 = vector.shape_cast %130 : vector<1x1x512xf32> to vector<1x512xf32>
    %132 = vector.broadcast %131 : vector<1x512xf32> to vector<8x512xf32>
    %133 = arith.mulf %129, %132 : vector<8x512xf32>
    %c24_82 = arith.constant 24 : index
    %c0_83 = arith.constant 0 : index
    %134 = vector.load %arg10[%c24_82, %c0_83] : memref<72x512xf32, #tpu.memory_space<vmem>>, vector<8x512xf32>
    tpu.vector_store %arg10[%c24_82, %c0_83], %133 {strides = array<i32>} : memref<72x512xf32, #tpu.memory_space<vmem>>, vector<8x512xf32>,
    %c4_84 = arith.constant 4 : index
    %c0_85 = arith.constant 0 : index
    %c0_86 = arith.constant 0 : index
    %135 = vector.load %arg1[%c4_84, %c0_85, %c0_86] : memref<9x1x512xf32, #tpu.memory_space<vmem>>, vector<1x1x512xf32>
    %136 = vector.shape_cast %135 : vector<1x1x512xf32> to vector<1x512xf32>
    %137 = vector.broadcast %136 : vector<1x512xf32> to vector<8x512xf32>
    %138 = arith.mulf %102, %137 : vector<8x512xf32>
    %c32_87 = arith.constant 32 : index
    %c0_88 = arith.constant 0 : index
    %139 = vector.load %arg10[%c32_87, %c0_88] : memref<72x512xf32, #tpu.memory_space<vmem>>, vector<8x512xf32>
    tpu.vector_store %arg10[%c32_87, %c0_88], %138 {strides = array<i32>} : memref<72x512xf32, #tpu.memory_space<vmem>>, vector<8x512xf32>,
    %140 = vector.extract_strided_slice %102 {offsets = [0, 1], sizes = [8, 511], strides = [1, 1]} : vector<8x512xf32> to vector<8x511xf32>
    %cst_89 = arith.constant 0.000000e+00 : f32
    %141 = vector.broadcast %cst_89 : f32 to vector<8x1xf32>
    %142 = tpu.concatenate %140, %141 in 1 : vector<8x511xf32>, vector<8x1xf32> -> vector<8x512xf32>
    %c5_90 = arith.constant 5 : index
    %c0_91 = arith.constant 0 : index
    %c0_92 = arith.constant 0 : index
    %143 = vector.load %arg1[%c5_90, %c0_91, %c0_92] : memref<9x1x512xf32, #tpu.memory_space<vmem>>, vector<1x1x512xf32>
    %144 = vector.shape_cast %143 : vector<1x1x512xf32> to vector<1x512xf32>
    %145 = vector.broadcast %144 : vector<1x512xf32> to vector<8x512xf32>
    %146 = arith.mulf %142, %145 : vector<8x512xf32>
    %c40_93 = arith.constant 40 : index
    %c0_94 = arith.constant 0 : index
    %147 = vector.load %arg10[%c40_93, %c0_94] : memref<72x512xf32, #tpu.memory_space<vmem>>, vector<8x512xf32>
    tpu.vector_store %arg10[%c40_93, %c0_94], %146 {strides = array<i32>} : memref<72x512xf32, #tpu.memory_space<vmem>>, vector<8x512xf32>,
    %148 = vector.extract_strided_slice %102 {offsets = [0, 15], sizes = [8, 497], strides = [1, 1]} : vector<8x512xf32> to vector<8x497xf32>
    %cst_95 = arith.constant 0.000000e+00 : f32
    %149 = vector.broadcast %cst_95 : f32 to vector<8x15xf32>
    %150 = tpu.concatenate %148, %149 in 1 : vector<8x497xf32>, vector<8x15xf32> -> vector<8x512xf32>
    %c6_96 = arith.constant 6 : index
    %c0_97 = arith.constant 0 : index
    %c0_98 = arith.constant 0 : index
    %151 = vector.load %arg1[%c6_96, %c0_97, %c0_98] : memref<9x1x512xf32, #tpu.memory_space<vmem>>, vector<1x1x512xf32>
    %152 = vector.shape_cast %151 : vector<1x1x512xf32> to vector<1x512xf32>
    %153 = vector.broadcast %152 : vector<1x512xf32> to vector<8x512xf32>
    %154 = arith.mulf %150, %153 : vector<8x512xf32>
    %c48_99 = arith.constant 48 : index
    %c0_100 = arith.constant 0 : index
    %155 = vector.load %arg10[%c48_99, %c0_100] : memref<72x512xf32, #tpu.memory_space<vmem>>, vector<8x512xf32>
    tpu.vector_store %arg10[%c48_99, %c0_100], %154 {strides = array<i32>} : memref<72x512xf32, #tpu.memory_space<vmem>>, vector<8x512xf32>,
    %156 = vector.extract_strided_slice %102 {offsets = [0, 16], sizes = [8, 496], strides = [1, 1]} : vector<8x512xf32> to vector<8x496xf32>
    %cst_101 = arith.constant 0.000000e+00 : f32
    %157 = vector.broadcast %cst_101 : f32 to vector<8x16xf32>
    %158 = tpu.concatenate %156, %157 in 1 : vector<8x496xf32>, vector<8x16xf32> -> vector<8x512xf32>
    %c7_102 = arith.constant 7 : index
    %c0_103 = arith.constant 0 : index
    %c0_104 = arith.constant 0 : index
    %159 = vector.load %arg1[%c7_102, %c0_103, %c0_104] : memref<9x1x512xf32, #tpu.memory_space<vmem>>, vector<1x1x512xf32>
    %160 = vector.shape_cast %159 : vector<1x1x512xf32> to vector<1x512xf32>
    %161 = vector.broadcast %160 : vector<1x512xf32> to vector<8x512xf32>
    %162 = arith.mulf %158, %161 : vector<8x512xf32>
    %c56_105 = arith.constant 56 : index
    %c0_106 = arith.constant 0 : index
    %163 = vector.load %arg10[%c56_105, %c0_106] : memref<72x512xf32, #tpu.memory_space<vmem>>, vector<8x512xf32>
    tpu.vector_store %arg10[%c56_105, %c0_106], %162 {strides = array<i32>} : memref<72x512xf32, #tpu.memory_space<vmem>>, vector<8x512xf32>,
    %164 = vector.extract_strided_slice %102 {offsets = [0, 17], sizes = [8, 495], strides = [1, 1]} : vector<8x512xf32> to vector<8x495xf32>
    %cst_107 = arith.constant 0.000000e+00 : f32
    %165 = vector.broadcast %cst_107 : f32 to vector<8x17xf32>
    %166 = tpu.concatenate %164, %165 in 1 : vector<8x495xf32>, vector<8x17xf32> -> vector<8x512xf32>
    %c8_108 = arith.constant 8 : index
    %c0_109 = arith.constant 0 : index
    %c0_110 = arith.constant 0 : index
    %167 = vector.load %arg1[%c8_108, %c0_109, %c0_110] : memref<9x1x512xf32, #tpu.memory_space<vmem>>, vector<1x1x512xf32>
    %168 = vector.shape_cast %167 : vector<1x1x512xf32> to vector<1x512xf32>
    %169 = vector.broadcast %168 : vector<1x512xf32> to vector<8x512xf32>
    %170 = arith.mulf %166, %169 : vector<8x512xf32>
    %c64_111 = arith.constant 64 : index
    %c0_112 = arith.constant 0 : index
    %171 = vector.load %arg10[%c64_111, %c0_112] : memref<72x512xf32, #tpu.memory_space<vmem>>, vector<8x512xf32>
    tpu.vector_store %arg10[%c64_111, %c0_112], %170 {strides = array<i32>} : memref<72x512xf32, #tpu.memory_space<vmem>>, vector<8x512xf32>,
    %c0_113 = arith.constant 0 : index
    %c0_114 = arith.constant 0 : index
    %172 = vector.load %arg5[%c0_113, %c0_114] : memref<8x72xbf16, #tpu.memory_space<vmem>>, vector<8x72xbf16>
    %c0_115 = arith.constant 0 : index
    %c0_116 = arith.constant 0 : index
    %173 = vector.load %arg10[%c0_115, %c0_116] : memref<72x512xf32, #tpu.memory_space<vmem>>, vector<72x512xf32>
    %174 = arith.truncf %173 : vector<72x512xf32> to vector<72x512xbf16>
    %cst_117 = arith.constant dense<0.000000e+00> : vector<8x512xf32>
    %175 = tpu.matmul %172, %174, %cst_117 {dimension_numbers = #tpu.dot_dimension_numbers<[1], [0], [0], [1], [0, 0, 1, 1], [], []>} : vector<8x72xbf16>, vector<72x512xbf16>, vector<8x512xf32> -> vector<8x512xf32>
    %cst_118 = arith.constant dense<0.000000e+00> : vector<8xf32>
    %176 = vector.multi_reduction <add>, %175, %cst_118 [1] : vector<8x512xf32> to vector<8xf32>
    %177 = vector.shape_cast %176 : vector<8xf32> to vector<8x1xf32>
    %178 = arith.mulf %175, %175 : vector<8x512xf32>
    %cst_119 = arith.constant dense<0.000000e+00> : vector<8xf32>
    %179 = vector.multi_reduction <add>, %178, %cst_119 [1] : vector<8x512xf32> to vector<8xf32>
    %180 = vector.shape_cast %179 : vector<8xf32> to vector<8x1xf32>
    %cst_120 = arith.constant 0.001953125 : f32
    %181 = vector.broadcast %cst_120 : f32 to vector<8x1xf32>
    %182 = arith.mulf %177, %181 : vector<8x1xf32>
    %cst_121 = arith.constant 0.001953125 : f32
    %183 = vector.broadcast %cst_121 : f32 to vector<8x1xf32>
    %184 = arith.mulf %180, %183 : vector<8x1xf32>
    %185 = arith.mulf %182, %182 : vector<8x1xf32>
    %186 = arith.subf %184, %185 : vector<8x1xf32>
    %cst_122 = arith.constant 9.99999974E-6 : f32
    %187 = vector.broadcast %cst_122 : f32 to vector<8x1xf32>
    %188 = arith.addf %186, %187 : vector<8x1xf32>
    %189 = math.rsqrt %188 : vector<8x1xf32>
    %c0_123 = arith.constant 0 : index
    %c0_124 = arith.constant 0 : index
    %190 = vector.load %arg6[%c0_123, %c0_124] : memref<8x1xf32, #tpu.memory_space<vmem>>, vector<8x1xf32>
    %191 = arith.mulf %189, %190 : vector<8x1xf32>
    %192 = vector.broadcast %182 : vector<8x1xf32> to vector<8x512xf32>
    %193 = arith.subf %175, %192 : vector<8x512xf32>
    %194 = vector.broadcast %191 : vector<8x1xf32> to vector<8x512xf32>
    %195 = arith.mulf %193, %194 : vector<8x512xf32>
    %c0_125 = arith.constant 0 : index
    %c0_126 = arith.constant 0 : index
    %196 = vector.load %arg7[%c0_125, %c0_126] : memref<8x1xf32, #tpu.memory_space<vmem>>, vector<8x1xf32>
    %197 = vector.broadcast %196 : vector<8x1xf32> to vector<8x512xf32>
    %198 = arith.addf %195, %197 : vector<8x512xf32>
    %c0_127 = arith.constant 0 : index
    %c0_128 = arith.constant 0 : index
    %199 = vector.load %arg9[%c0_127, %c0_128] : memref<8x512xf32, #tpu.memory_space<vmem>>, vector<8x512xf32>
    %200 = arith.addf %198, %199 : vector<8x512xf32>
    %cst_129 = arith.constant 0.000000e+00 : f32
    %201 = vector.broadcast %cst_129 : f32 to vector<8x512xf32>
    %202 = arith.maximumf %200, %201 : vector<8x512xf32>
    %203 = vector.extract_strided_slice %202 {offsets = [0, 0], sizes = [8, 256], strides = [1, 1]} : vector<8x512xf32> to vector<8x256xf32>
    %c0_130 = arith.constant 0 : index
    %c0_131 = arith.constant 0 : index
    %204 = vector.load %arg8[%c0_130, %c0_131] : memref<16x256xf32, #tpu.memory_space<vmem>>, vector<8x256xf32>
    tpu.vector_store %arg8[%c0_130, %c0_131], %203 {strides = array<i32>} : memref<16x256xf32, #tpu.memory_space<vmem>>, vector<8x256xf32>,
    %205 = vector.extract_strided_slice %202 {offsets = [0, 256], sizes = [8, 256], strides = [1, 1]} : vector<8x512xf32> to vector<8x256xf32>
    %c8_132 = arith.constant 8 : index
    %c0_133 = arith.constant 0 : index
    %206 = vector.load %arg8[%c8_132, %c0_133] : memref<16x256xf32, #tpu.memory_space<vmem>>, vector<8x256xf32>
    tpu.vector_store %arg8[%c8_132, %c0_133], %205 {strides = array<i32>} : memref<16x256xf32, #tpu.memory_space<vmem>>, vector<8x256xf32>,
    return
  }
}

</mosaic_0001>

<llo_original>
// kernel: basic_block.1
$region0: #{basic_block.1}
  #allocation0 [shape = 'u32[]', space=smem, size = 0x4, offset = 0x4, fixed_abs, tag = 'smem constant byte address 0x4 - core index']
  #allocation1 [shape = 'u32[144,128]{1,0:T(1,128)}', space=vmem, size = 0x12000, scoped, tag = 'internal scratch']
  #allocation2 [shape = 'f32[8,512]{1,0:T(8,128)}', space=vmem, size = 0x4000, scoped, tag = 'scratch operand']
  #allocation3 [shape = 'f32[72,512]{1,0:T(8,128)}', space=vmem, size = 0x24000, scoped, tag = 'scratch operand']
  %s0 = inlined_call_operand.vmem [shape: f32[16,256], index: 0, kind: input, shape index: {}]
  %s1 = inlined_call_operand.vmem [shape: f32[9,1,512], index: 1, kind: input, shape index: {}]
  %s2 = inlined_call_operand.vmem [shape: bf16[8,72], index: 2, kind: input, shape index: {}]
  %s3 = inlined_call_operand.vmem [shape: f32[8,1], index: 3, kind: input, shape index: {}]
  %s4 = inlined_call_operand.vmem [shape: f32[8,1], index: 4, kind: input, shape index: {}]
  %s5 = inlined_call_operand.vmem [shape: bf16[8,72], index: 5, kind: input, shape index: {}]
  %s6 = inlined_call_operand.vmem [shape: f32[8,1], index: 6, kind: input, shape index: {}]
  %s7 = inlined_call_operand.vmem [shape: f32[8,1], index: 7, kind: input, shape index: {}]
  %s8 = inlined_call_operand.vmem [shape: f32[16,256], index: 8, kind: output, shape index: {}]
  %s9 = sld [smem:[#allocation0]]
  $region42: #{basic_block.1} parent=0
    _
  %s11 = ssub.s32 1, %s9
  %s12 = scalar_select 0, %s11, %s9
  // Predicated region
  $region2: #{basic_block.1} parent=0 // pred_check
    _
  $region3: #{basic_block.1} parent=0 // pred_check_branch
    %14 = sbr.rel (0) target = $region5
  $region4: #{basic_block.1} parent=0 // pred_region
    _
  $region5: #{basic_block.1} parent=0 // pred_fallthru
    _
  // Predicated region
  $region6: #{basic_block.1} parent=0 // pred_check
    _
  $region7: #{basic_block.1} parent=0 // pred_check_branch
    %16 = sbr.rel (0) target = $region9
  $region8: #{basic_block.1} parent=0 // pred_region
    _
  $region9: #{basic_block.1} parent=0 // pred_fallthru
    _
  // Predicated region
  $region10: #{basic_block.1} parent=0 // pred_check
    _
  $region11: #{basic_block.1} parent=0 // pred_check_branch
    %18 = sbr.rel (0) target = $region13
  $region12: #{basic_block.1} parent=0 // pred_region
    _
  $region13: #{basic_block.1} parent=0 // pred_fallthru
    _
  // Predicated region
  $region14: #{basic_block.1} parent=0 // pred_check
    _
  $region15: #{basic_block.1} parent=0 // pred_check_branch
    %20 = sbr.rel (0) target = $region17
  $region16: #{basic_block.1} parent=0 // pred_region
    _
  $region17: #{basic_block.1} parent=0 // pred_fallthru
    _
  // Predicated region
  $region18: #{basic_block.1} parent=0 // pred_check
    _
  $region19: #{basic_block.1} parent=0 // pred_check_branch
    %22 = sbr.rel (0) target = $region21
  $region20: #{basic_block.1} parent=0 // pred_region
    _
  $region21: #{basic_block.1} parent=0 // pred_fallthru
    _
  // Predicated region
  $region22: #{basic_block.1} parent=0 // pred_check
    _
  $region23: #{basic_block.1} parent=0 // pred_check_branch
    %24 = sbr.rel (0) target = $region25
  $region24: #{basic_block.1} parent=0 // pred_region
    _
  $region25: #{basic_block.1} parent=0 // pred_fallthru
    _
  // Predicated region
  $region26: #{basic_block.1} parent=0 // pred_check
    _
  $region27: #{basic_block.1} parent=0 // pred_check_branch
    %26 = sbr.rel (0) target = $region29
  $region28: #{basic_block.1} parent=0 // pred_region
    _
  $region29: #{basic_block.1} parent=0 // pred_fallthru
    _
  // Predicated region
  $region30: #{basic_block.1} parent=0 // pred_check
    _
  $region31: #{basic_block.1} parent=0 // pred_check_branch
    %28 = sbr.rel (0) target = $region33
  $region32: #{basic_block.1} parent=0 // pred_region
    _
  $region33: #{basic_block.1} parent=0 // pred_fallthru
    _
  %v30 = vld [vmem:[%s0] sm:$0xff]
  %v31 = vld [vmem:[%s0 + $0x8] sm:$0xff]
  %32 = vst [vmem:[#allocation2] sm:$0xff] %v30
  %33 = vst [vmem:[#allocation2 + $0x8] sm:$0xff] %v31
  %v34 = vld [vmem:[%s0 + $0x10] sm:$0xff]
  %v35 = vld [vmem:[%s0 + $0x18] sm:$0xff]
  %36 = vst [vmem:[#allocation2 + $0x10] sm:$0xff] %v34
  %37 = vst [vmem:[#allocation2 + $0x18] sm:$0xff] %v35
  %v38 = vld [vmem:[#allocation2] sm:$0xff]
  %v39 = vld [vmem:[#allocation2 + $0x8] sm:$0xff]
  %v40 = vld [vmem:[#allocation2 + $0x10] sm:$0xff]
  %v41 = vld [vmem:[#allocation2 + $0x18] sm:$0xff]
  %46 = vrot.lane.b32.xlu0 %v38, 17
  %v47 = vpop.permute.xlu0 %46
  %48 = vrot.lane.b32.xlu0 %v39, 17
  %v49 = vpop.permute.xlu0 %48
  %50 = vrot.lane.b32.xlu0 %v40, 17
  %v51 = vpop.permute.xlu0 %50
  %52 = vrot.lane.b32.xlu0 %v41, 17
  %v53 = vpop.permute.xlu0 %52
  %vm54 = vcmask 138240
  %v55 = vsel %vm54, %v47, %v49
  %v56 = vsel %vm54, %v49, %v51
  %v57 = vsel %vm54, %v51, %v53
  %v62 = vsel %vm54, 0.0, %v47
  %v63 = vld [vmem:[%s1] sm:$0xf]
  %v65 = vlaneseq
  %v66 = vshrl.u32 %v65, 7
  %v67 = vsub.s32 0, %v66
  %v68 = vrot.slane %v63, %v67
  %v69 = vlaneseq
  %v70 = vshrl.u32 %v69, 7
  %v71 = vsub.s32 1, %v70
  %v72 = vrot.slane %v63, %v71
  %v73 = vlaneseq
  %v74 = vshrl.u32 %v73, 7
  %v75 = vsub.s32 2, %v74
  %v76 = vrot.slane %v63, %v75
  %v77 = vlaneseq
  %v78 = vshrl.u32 %v77, 7
  %v79 = vsub.s32 3, %v78
  %v80 = vrot.slane %v63, %v79
  %v85 = vmul.f32 %v62, %v68
  %v86 = vmul.f32 %v55, %v72
  %v87 = vmul.f32 %v56, %v76
  %v88 = vmul.f32 %v57, %v80
  %89 = vst [vmem:[#allocation3] sm:$0xff] %v85
  %90 = vst [vmem:[#allocation3 + $0x8] sm:$0xff] %v86
  %91 = vst [vmem:[#allocation3 + $0x10] sm:$0xff] %v87
  %92 = vst [vmem:[#allocation3 + $0x18] sm:$0xff] %v88
  %93 = vrot.lane.b32.xlu0 %v38, 16
  %v94 = vpop.permute.xlu0 %93
  %95 = vrot.lane.b32.xlu0 %v39, 16
  %v96 = vpop.permute.xlu0 %95
  %97 = vrot.lane.b32.xlu0 %v40, 16
  %v98 = vpop.permute.xlu0 %97
  %99 = vrot.lane.b32.xlu0 %v41, 16
  %v100 = vpop.permute.xlu0 %99
  %vm101 = vcmask 130048
  %v102 = vsel %vm101, %v94, %v96
  %v103 = vsel %vm101, %v96, %v98
  %v104 = vsel %vm101, %v98, %v100
  %v109 = vsel %vm101, 0.0, %v94
  %s110 = scalar_lea.vmem %s1, 4
  %v111 = vld [vmem:[%s110] sm:$0xf]
  %v113 = vlaneseq
  %v114 = vshrl.u32 %v113, 7
  %v115 = vsub.s32 0, %v114
  %v116 = vrot.slane %v111, %v115
  %v117 = vlaneseq
  %v118 = vshrl.u32 %v117, 7
  %v119 = vsub.s32 1, %v118
  %v120 = vrot.slane %v111, %v119
  %v121 = vlaneseq
  %v122 = vshrl.u32 %v121, 7
  %v123 = vsub.s32 2, %v122
  %v124 = vrot.slane %v111, %v123
  %v125 = vlaneseq
  %v126 = vshrl.u32 %v125, 7
  %v127 = vsub.s32 3, %v126
  %v128 = vrot.slane %v111, %v127
  %v133 = vmul.f32 %v109, %v116
  %v134 = vmul.f32 %v102, %v120
  %v135 = vmul.f32 %v103, %v124
  %v136 = vmul.f32 %v104, %v128
  %137 = vst [vmem:[#allocation3 + $0x20] sm:$0xff] %v133
  %138 = vst [vmem:[#allocation3 + $0x28] sm:$0xff] %v134
  %139 = vst [vmem:[#allocation3 + $0x30] sm:$0xff] %v135
  %140 = vst [vmem:[#allocation3 + $0x38] sm:$0xff] %v136
  %141 = vrot.lane.b32.xlu0 %v38, 15
  %v142 = vpop.permute.xlu0 %141
  %143 = vrot.lane.b32.xlu0 %v39, 15
  %v144 = vpop.permute.xlu0 %143
  %145 = vrot.lane.b32.xlu0 %v40, 15
  %v146 = vpop.permute.xlu0 %145
  %147 = vrot.lane.b32.xlu0 %v41, 15
  %v148 = vpop.permute.xlu0 %147
  %vm149 = vcmask 121856
  %v150 = vsel %vm149, %v142, %v144
  %v151 = vsel %vm149, %v144, %v146
  %v152 = vsel %vm149, %v146, %v148
  %v157 = vsel %vm149, 0.0, %v142
  %s158 = scalar_lea.vmem %s1, 8
  %v159 = vld [vmem:[%s158] sm:$0xf]
  %v161 = vlaneseq
  %v162 = vshrl.u32 %v161, 7
  %v163 = vsub.s32 0, %v162
  %v164 = vrot.slane %v159, %v163
  %v165 = vlaneseq
  %v166 = vshrl.u32 %v165, 7
  %v167 = vsub.s32 1, %v166
  %v168 = vrot.slane %v159, %v167
  %v169 = vlaneseq
  %v170 = vshrl.u32 %v169, 7
  %v171 = vsub.s32 2, %v170
  %v172 = vrot.slane %v159, %v171
  %v173 = vlaneseq
  %v174 = vshrl.u32 %v173, 7
  %v175 = vsub.s32 3, %v174
  %v176 = vrot.slane %v159, %v175
  %v181 = vmul.f32 %v157, %v164
  %v182 = vmul.f32 %v150, %v168
  %v183 = vmul.f32 %v151, %v172
  %v184 = vmul.f32 %v152, %v176
  %185 = vst [vmem:[#allocation3 + $0x40] sm:$0xff] %v181
  %186 = vst [vmem:[#allocation3 + $0x48] sm:$0xff] %v182
  %187 = vst [vmem:[#allocation3 + $0x50] sm:$0xff] %v183
  %188 = vst [vmem:[#allocation3 + $0x58] sm:$0xff] %v184
  %189 = vrot.lane.b32.xlu0 %v38, 1
  %v190 = vpop.permute.xlu0 %189
  %191 = vrot.lane.b32.xlu0 %v39, 1
  %v192 = vpop.permute.xlu0 %191
  %193 = vrot.lane.b32.xlu0 %v40, 1
  %v194 = vpop.permute.xlu0 %193
  %195 = vrot.lane.b32.xlu0 %v41, 1
  %v196 = vpop.permute.xlu0 %195
  %vm197 = vcmask 7168
  %v198 = vsel %vm197, %v190, %v192
  %v199 = vsel %vm197, %v192, %v194
  %v200 = vsel %vm197, %v194, %v196
  %v205 = vsel %vm197, 0.0, %v190
  %s206 = scalar_lea.vmem %s1, 12
  %v207 = vld [vmem:[%s206] sm:$0xf]
  %v209 = vlaneseq
  %v210 = vshrl.u32 %v209, 7
  %v211 = vsub.s32 0, %v210
  %v212 = vrot.slane %v207, %v211
  %v213 = vlaneseq
  %v214 = vshrl.u32 %v213, 7
  %v215 = vsub.s32 1, %v214
  %v216 = vrot.slane %v207, %v215
  %v217 = vlaneseq
  %v218 = vshrl.u32 %v217, 7
  %v219 = vsub.s32 2, %v218
  %v220 = vrot.slane %v207, %v219
  %v221 = vlaneseq
  %v222 = vshrl.u32 %v221, 7
  %v223 = vsub.s32 3, %v222
  %v224 = vrot.slane %v207, %v223
  %v229 = vmul.f32 %v205, %v212
  %v230 = vmul.f32 %v198, %v216
  %v231 = vmul.f32 %v199, %v220
  %v232 = vmul.f32 %v200, %v224
  %233 = vst [vmem:[#allocation3 + $0x60] sm:$0xff] %v229
  %234 = vst [vmem:[#allocation3 + $0x68] sm:$0xff] %v230
  %235 = vst [vmem:[#allocation3 + $0x70] sm:$0xff] %v231
  %236 = vst [vmem:[#allocation3 + $0x78] sm:$0xff] %v232
  %s237 = scalar_lea.vmem %s1, 16
  %v238 = vld [vmem:[%s237] sm:$0xf]
  %v240 = vlaneseq
  %v241 = vshrl.u32 %v240, 7
  %v242 = vsub.s32 0, %v241
  %v243 = vrot.slane %v238, %v242
  %v244 = vlaneseq
  %v245 = vshrl.u32 %v244, 7
  %v246 = vsub.s32 1, %v245
  %v247 = vrot.slane %v238, %v246
  %v248 = vlaneseq
  %v249 = vshrl.u32 %v248, 7
  %v250 = vsub.s32 2, %v249
  %v251 = vrot.slane %v238, %v250
  %v252 = vlaneseq
  %v253 = vshrl.u32 %v252, 7
  %v254 = vsub.s32 3, %v253
  %v255 = vrot.slane %v238, %v254
  %v260 = vmul.f32 %v38, %v243
  %v261 = vmul.f32 %v39, %v247
  %v262 = vmul.f32 %v40, %v251
  %v263 = vmul.f32 %v41, %v255
  %264 = vst [vmem:[#allocation3 + $0x80] sm:$0xff] %v260
  %265 = vst [vmem:[#allocation3 + $0x88] sm:$0xff] %v261
  %266 = vst [vmem:[#allocation3 + $0x90] sm:$0xff] %v262
  %267 = vst [vmem:[#allocation3 + $0x98] sm:$0xff] %v263
  %268 = vrot.lane.b32.xlu0 %v38, 127
  %v269 = vpop.permute.xlu0 %268
  %270 = vrot.lane.b32.xlu0 %v39, 127
  %v271 = vpop.permute.xlu0 %270
  %272 = vrot.lane.b32.xlu0 %v40, 127
  %v273 = vpop.permute.xlu0 %272
  %274 = vrot.lane.b32.xlu0 %v41, 127
  %v275 = vpop.permute.xlu0 %274
  %vm276 = vcmask 1039360
  %v277 = vsel %vm276, %v269, %v271
  %v278 = vsel %vm276, %v271, %v273
  %v279 = vsel %vm276, %v273, %v275
  %v284 = vsel %vm276, %v275, 0.0
  %s285 = scalar_lea.vmem %s1, 20
  %v286 = vld [vmem:[%s285] sm:$0xf]
  %v288 = vlaneseq
  %v289 = vshrl.u32 %v288, 7
  %v290 = vsub.s32 0, %v289
  %v291 = vrot.slane %v286, %v290
  %v292 = vlaneseq
  %v293 = vshrl.u32 %v292, 7
  %v294 = vsub.s32 1, %v293
  %v295 = vrot.slane %v286, %v294
  %v296 = vlaneseq
  %v297 = vshrl.u32 %v296, 7
  %v298 = vsub.s32 2, %v297
  %v299 = vrot.slane %v286, %v298
  %v300 = vlaneseq
  %v301 = vshrl.u32 %v300, 7
  %v302 = vsub.s32 3, %v301
  %v303 = vrot.slane %v286, %v302
  %v308 = vmul.f32 %v277, %v291
  %v309 = vmul.f32 %v278, %v295
  %v310 = vmul.f32 %v279, %v299
  %v311 = vmul.f32 %v284, %v303
  %312 = vst [vmem:[#allocation3 + $0xa0] sm:$0xff] %v308
  %313 = vst [vmem:[#allocation3 + $0xa8] sm:$0xff] %v309
  %314 = vst [vmem:[#allocation3 + $0xb0] sm:$0xff] %v310
  %315 = vst [vmem:[#allocation3 + $0xb8] sm:$0xff] %v311
  %316 = vrot.lane.b32.xlu0 %v38, 113
  %v317 = vpop.permute.xlu0 %316
  %318 = vrot.lane.b32.xlu0 %v39, 113
  %v319 = vpop.permute.xlu0 %318
  %320 = vrot.lane.b32.xlu0 %v40, 113
  %v321 = vpop.permute.xlu0 %320
  %322 = vrot.lane.b32.xlu0 %v41, 113
  %v323 = vpop.permute.xlu0 %322
  %vm324 = vcmask 924672
  %v325 = vsel %vm324, %v317, %v319
  %v326 = vsel %vm324, %v319, %v321
  %v327 = vsel %vm324, %v321, %v323
  %v332 = vsel %vm324, %v323, 0.0
  %s333 = scalar_lea.vmem %s1, 24
  %v334 = vld [vmem:[%s333] sm:$0xf]
  %v336 = vlaneseq
  %v337 = vshrl.u32 %v336, 7
  %v338 = vsub.s32 0, %v337
  %v339 = vrot.slane %v334, %v338
  %v340 = vlaneseq
  %v341 = vshrl.u32 %v340, 7
  %v342 = vsub.s32 1, %v341
  %v343 = vrot.slane %v334, %v342
  %v344 = vlaneseq
  %v345 = vshrl.u32 %v344, 7
  %v346 = vsub.s32 2, %v345
  %v347 = vrot.slane %v334, %v346
  %v348 = vlaneseq
  %v349 = vshrl.u32 %v348, 7
  %v350 = vsub.s32 3, %v349
  %v351 = vrot.slane %v334, %v350
  %v356 = vmul.f32 %v325, %v339
  %v357 = vmul.f32 %v326, %v343
  %v358 = vmul.f32 %v327, %v347
  %v359 = vmul.f32 %v332, %v351
  %360 = vst [vmem:[#allocation3 + $0xc0] sm:$0xff] %v356
  %361 = vst [vmem:[#allocation3 + $0xc8] sm:$0xff] %v357
  %362 = vst [vmem:[#allocation3 + $0xd0] sm:$0xff] %v358
  %363 = vst [vmem:[#allocation3 + $0xd8] sm:$0xff] %v359
  %364 = vrot.lane.b32.xlu0 %v38, 112
  %v365 = vpop.permute.xlu0 %364
  %366 = vrot.lane.b32.xlu0 %v39, 112
  %v367 = vpop.permute.xlu0 %366
  %368 = vrot.lane.b32.xlu0 %v40, 112
  %v369 = vpop.permute.xlu0 %368
  %370 = vrot.lane.b32.xlu0 %v41, 112
  %v371 = vpop.permute.xlu0 %370
  %vm372 = vcmask 916480
  %v373 = vsel %vm372, %v365, %v367
  %v374 = vsel %vm372, %v367, %v369
  %v375 = vsel %vm372, %v369, %v371
  %v380 = vsel %vm372, %v371, 0.0
  %s381 = scalar_lea.vmem %s1, 28
  %v382 = vld [vmem:[%s381] sm:$0xf]
  %v384 = vlaneseq
  %v385 = vshrl.u32 %v384, 7
  %v386 = vsub.s32 0, %v385
  %v387 = vrot.slane %v382, %v386
  %v388 = vlaneseq
  %v389 = vshrl.u32 %v388, 7
  %v390 = vsub.s32 1, %v389
  %v391 = vrot.slane %v382, %v390
  %v392 = vlaneseq
  %v393 = vshrl.u32 %v392, 7
  %v394 = vsub.s32 2, %v393
  %v395 = vrot.slane %v382, %v394
  %v396 = vlaneseq
  %v397 = vshrl.u32 %v396, 7
  %v398 = vsub.s32 3, %v397
  %v399 = vrot.slane %v382, %v398
  %v404 = vmul.f32 %v373, %v387
  %v405 = vmul.f32 %v374, %v391
  %v406 = vmul.f32 %v375, %v395
  %v407 = vmul.f32 %v380, %v399
  %408 = vst [vmem:[#allocation3 + $0xe0] sm:$0xff] %v404
  %409 = vst [vmem:[#allocation3 + $0xe8] sm:$0xff] %v405
  %410 = vst [vmem:[#allocation3 + $0xf0] sm:$0xff] %v406
  %411 = vst [vmem:[#allocation3 + $0xf8] sm:$0xff] %v407
  %412 = vrot.lane.b32.xlu0 %v38, 111
  %v413 = vpop.permute.xlu0 %412
  %414 = vrot.lane.b32.xlu0 %v39, 111
  %v415 = vpop.permute.xlu0 %414
  %416 = vrot.lane.b32.xlu0 %v40, 111
  %v417 = vpop.permute.xlu0 %416
  %418 = vrot.lane.b32.xlu0 %v41, 111
  %v419 = vpop.permute.xlu0 %418
  %vm420 = vcmask 908288
  %v421 = vsel %vm420, %v413, %v415
  %v422 = vsel %vm420, %v415, %v417
  %v423 = vsel %vm420, %v417, %v419
  %v428 = vsel %vm420, %v419, 0.0
  %s429 = scalar_lea.vmem %s1, 32
  %v430 = vld [vmem:[%s429] sm:$0xf]
  %v432 = vlaneseq
  %v433 = vshrl.u32 %v432, 7
  %v434 = vsub.s32 0, %v433
  %v435 = vrot.slane %v430, %v434
  %v436 = vlaneseq
  %v437 = vshrl.u32 %v436, 7
  %v438 = vsub.s32 1, %v437
  %v439 = vrot.slane %v430, %v438
  %v440 = vlaneseq
  %v441 = vshrl.u32 %v440, 7
  %v442 = vsub.s32 2, %v441
  %v443 = vrot.slane %v430, %v442
  %v444 = vlaneseq
  %v445 = vshrl.u32 %v444, 7
  %v446 = vsub.s32 3, %v445
  %v447 = vrot.slane %v430, %v446
  %v452 = vmul.f32 %v421, %v435
  %v453 = vmul.f32 %v422, %v439
  %v454 = vmul.f32 %v423, %v443
  %v455 = vmul.f32 %v428, %v447
  %456 = vst [vmem:[#allocation3 + $0x100] sm:$0xff] %v452
  %457 = vst [vmem:[#allocation3 + $0x108] sm:$0xff] %v453
  %458 = vst [vmem:[#allocation3 + $0x110] sm:$0xff] %v454
  %459 = vst [vmem:[#allocation3 + $0x118] sm:$0xff] %v455
  %v460 = vld [vmem:[%s2] sm:$0xf]
  %v461 = vld [vmem:[#allocation3] sm:$0xff]
  %v462 = vld [vmem:[#allocation3 + $0x8] sm:$0xff]
  %v463 = vld [vmem:[#allocation3 + $0x10] sm:$0xff]
  %v464 = vld [vmem:[#allocation3 + $0x18] sm:$0xff]
  %v465 = vld [vmem:[#allocation3 + $0x20] sm:$0xff]
  %v466 = vld [vmem:[#allocation3 + $0x28] sm:$0xff]
  %v467 = vld [vmem:[#allocation3 + $0x30] sm:$0xff]
  %v468 = vld [vmem:[#allocation3 + $0x38] sm:$0xff]
  %v469 = vld [vmem:[#allocation3 + $0x40] sm:$0xff]
  %v470 = vld [vmem:[#allocation3 + $0x48] sm:$0xff]
  %v471 = vld [vmem:[#allocation3 + $0x50] sm:$0xff]
  %v472 = vld [vmem:[#allocation3 + $0x58] sm:$0xff]
  %v473 = vld [vmem:[#allocation3 + $0x60] sm:$0xff]
  %v474 = vld [vmem:[#allocation3 + $0x68] sm:$0xff]
  %v475 = vld [vmem:[#allocation3 + $0x70] sm:$0xff]
  %v476 = vld [vmem:[#allocation3 + $0x78] sm:$0xff]
  %v477 = vld [vmem:[#allocation3 + $0x80] sm:$0xff]
  %v478 = vld [vmem:[#allocation3 + $0x88] sm:$0xff]
  %v479 = vld [vmem:[#allocation3 + $0x90] sm:$0xff]
  %v480 = vld [vmem:[#allocation3 + $0x98] sm:$0xff]
  %v481 = vld [vmem:[#allocation3 + $0xa0] sm:$0xff]
  %v482 = vld [vmem:[#allocation3 + $0xa8] sm:$0xff]
  %v483 = vld [vmem:[#allocation3 + $0xb0] sm:$0xff]
  %v484 = vld [vmem:[#allocation3 + $0xb8] sm:$0xff]
  %v485 = vld [vmem:[#allocation3 + $0xc0] sm:$0xff]
  %v486 = vld [vmem:[#allocation3 + $0xc8] sm:$0xff]
  %v487 = vld [vmem:[#allocation3 + $0xd0] sm:$0xff]
  %v488 = vld [vmem:[#allocation3 + $0xd8] sm:$0xff]
  %v489 = vld [vmem:[#allocation3 + $0xe0] sm:$0xff]
  %v490 = vld [vmem:[#allocation3 + $0xe8] sm:$0xff]
  %v491 = vld [vmem:[#allocation3 + $0xf0] sm:$0xff]
  %v492 = vld [vmem:[#allocation3 + $0xf8] sm:$0xff]
  %v493 = vld [vmem:[#allocation3 + $0x100] sm:$0xff]
  %v494 = vld [vmem:[#allocation3 + $0x108] sm:$0xff]
  %v495 = vld [vmem:[#allocation3 + $0x110] sm:$0xff]
  %v496 = vld [vmem:[#allocation3 + $0x118] sm:$0xff]
  %v497 = vpack.c.bf16 %v465, %v461
  %v498 = vpack.c.bf16 %v466, %v462
  %v499 = vpack.c.bf16 %v467, %v463
  %v500 = vpack.c.bf16 %v468, %v464
  %v501 = vpack.c.bf16 %v473, %v469
  %v502 = vpack.c.bf16 %v474, %v470
  %v503 = vpack.c.bf16 %v475, %v471
  %v504 = vpack.c.bf16 %v476, %v472
  %v505 = vpack.c.bf16 %v481, %v477
  %v506 = vpack.c.bf16 %v482, %v478
  %v507 = vpack.c.bf16 %v483, %v479
  %v508 = vpack.c.bf16 %v484, %v480
  %v509 = vpack.c.bf16 %v489, %v485
  %v510 = vpack.c.bf16 %v490, %v486
  %v511 = vpack.c.bf16 %v491, %v487
  %v512 = vpack.c.bf16 %v492, %v488
  %v513 = vpack.c.bf16 %v493, %v493
  %v514 = vpack.c.bf16 %v494, %v494
  %v515 = vpack.c.bf16 %v495, %v495
  %v516 = vpack.c.bf16 %v496, %v496
  %vm517 = vcmask 588800
  %v519 = vsel %vm517, %v460, 0
  %vm521 = vcmask 1043456
  %v523 = vsel %vm521, %v513, 0
  %v526 = vsel %vm521, %v514, 0
  %v529 = vsel %vm521, %v515, 0
  %v532 = vsel %vm521, %v516, 0
  %534 = vmatprep.subr.bf16.mxu0 %v498
  %535 = vmatpush1.bf16.msra.mxu0 %v497
  %536 = vmatprep.subr.bf16.mxu0 %v502
  %537 = vmatpush1.bf16.msra.mxu0 %v501
  %538 = vmatprep.subr.bf16.mxu0 %v506
  %539 = vmatpush1.bf16.msra.mxu0 %v505
  %540 = vmatprep.subr.bf16.mxu0 %v510
  %541 = vmatpush1.bf16.msra.mxu0 %v509
  %542 = vmatprep.subr.bf16.mxu0 %v526
  %543 = vmatpush1.bf16.msra.mxu0 %v523
  %544 = vmatprep.subr.bf16.mxu0 0
  %545 = vmatpush1.bf16.msra.mxu0 0
  %546 = vmatprep.subr.bf16.mxu0 0
  %547 = vmatpush1.bf16.msra.mxu0 0
  %548 = vmatprep.subr.bf16.mxu0 0
  %549 = vmatpush1.bf16.msra.mxu0 0
  %550 = vmatprep.subr.bf16.mxu0 0
  %551 = vmatpush1.bf16.msra.mxu0 0
  %552 = vmatprep.subr.bf16.mxu0 0
  %553 = vmatpush1.bf16.msra.mxu0 0
  %554 = vmatprep.subr.bf16.mxu0 0
  %555 = vmatpush1.bf16.msra.mxu0 0
  %556 = vmatprep.subr.bf16.mxu0 0
  %557 = vmatpush1.bf16.msra.mxu0 0
  %558 = vmatprep.subr.bf16.mxu0 0
  %559 = vmatpush1.bf16.msra.mxu0 0
  %560 = vmatprep.subr.bf16.mxu0 0
  %561 = vmatpush1.bf16.msra.mxu0 0
  %562 = vmatprep.subr.bf16.mxu0 0
  %563 = vmatpush1.bf16.msra.mxu0 0
  %564 = vmatprep.subr.bf16.mxu0 0
  %565 = vmatpush1.bf16.msra.mxu0 0
  %566 = vmatprep.mubr.bf16.mxu0 0
  %567 = vmatmul.mubr.bf16.gmra.mrb[0].mxu0 %v519
  %v568 = vpop.f32.mrb[0].mxu0
  %v569 = vadd.f32 0.0, %v568
  %v570 = vpop.f32.mrb[0].mxu0
  %v571 = vadd.f32 0.0, %v570
  %v572 = vpop.f32.mrb[0].mxu0
  %v573 = vpop.f32.mrb[0].mxu0
  %574 = vdwg.mxu0
  %575 = vmatprep.subr.bf16.mxu0 %v500
  %576 = vmatpush1.bf16.msra.mxu0 %v499
  %577 = vmatprep.subr.bf16.mxu0 %v504
  %578 = vmatpush1.bf16.msra.mxu0 %v503
  %579 = vmatprep.subr.bf16.mxu0 %v508
  %580 = vmatpush1.bf16.msra.mxu0 %v507
  %581 = vmatprep.subr.bf16.mxu0 %v512
  %582 = vmatpush1.bf16.msra.mxu0 %v511
  %583 = vmatprep.subr.bf16.mxu0 %v532
  %584 = vmatpush1.bf16.msra.mxu0 %v529
  %585 = vmatprep.subr.bf16.mxu0 0
  %586 = vmatpush1.bf16.msra.mxu0 0
  %587 = vmatprep.subr.bf16.mxu0 0
  %588 = vmatpush1.bf16.msra.mxu0 0
  %589 = vmatprep.subr.bf16.mxu0 0
  %590 = vmatpush1.bf16.msra.mxu0 0
  %591 = vmatprep.subr.bf16.mxu0 0
  %592 = vmatpush1.bf16.msra.mxu0 0
  %593 = vmatprep.subr.bf16.mxu0 0
  %594 = vmatpush1.bf16.msra.mxu0 0
  %595 = vmatprep.subr.bf16.mxu0 0
  %596 = vmatpush1.bf16.msra.mxu0 0
  %597 = vmatprep.subr.bf16.mxu0 0
  %598 = vmatpush1.bf16.msra.mxu0 0
  %599 = vmatprep.subr.bf16.mxu0 0
  %600 = vmatpush1.bf16.msra.mxu0 0
  %601 = vmatprep.subr.bf16.mxu0 0
  %602 = vmatpush1.bf16.msra.mxu0 0
  %603 = vmatprep.subr.bf16.mxu0 0
  %604 = vmatpush1.bf16.msra.mxu0 0
  %605 = vmatprep.subr.bf16.mxu0 0
  %606 = vmatpush1.bf16.msra.mxu0 0
  %607 = vmatprep.mubr.bf16.mxu0 0
  %608 = vmatmul.mubr.bf16.gmra.mrb[0].mxu0 %v519
  %v609 = vpop.f32.mrb[0].mxu0
  %v610 = vadd.f32 0.0, %v609
  %v611 = vpop.f32.mrb[0].mxu0
  %v612 = vadd.f32 0.0, %v611
  %v613 = vpop.f32.mrb[0].mxu0
  %v614 = vpop.f32.mrb[0].mxu0
  %615 = vdwg.mxu0
  %v616 = vadd.f32 %v569, %v571
  %v617 = vadd.f32 %v616, %v610
  %v618 = vadd.f32 %v617, %v612
  %619 = vadd.xlane.f32.xlu0 %v618
  %v620 = vpop.xlane.xlu0 %619
  %v621 = vmul.f32 %v569, %v569
  %v622 = vmul.f32 %v571, %v571
  %v623 = vmul.f32 %v610, %v610
  %v624 = vmul.f32 %v612, %v612
  %v625 = vadd.f32 %v621, %v622
  %v626 = vadd.f32 %v625, %v623
  %v627 = vadd.f32 %v626, %v624
  %628 = vadd.xlane.f32.xlu0 %v627
  %v629 = vpop.xlane.xlu0 %628
  %v630 = vmul.f32 %v620, 0.001953125
  %v631 = vmul.f32 %v629, 0.001953125
  %v632 = vmul.f32 %v630, %v630
  %v633 = vsub.f32 %v631, %v632
  %v634 = vadd.f32 %v633, 1e-05
  %v635 = vrsqrt.pop %v634
  %v636 = vld [vmem:[%s3] sm:$0xff]
  %v637 = vmul.f32 %v635, %v636
  %v638 = vsub.f32 %v569, %v630
  %v639 = vsub.f32 %v571, %v630
  %v640 = vsub.f32 %v610, %v630
  %v641 = vsub.f32 %v612, %v630
  %643 = vset.pattern.permute.xlu0 0
  %644 = vperm.xlu0 %643, %v637
  %v645 = vpop.permute.xlu0 %644
  %v647 = vmul.f32 %v638, %v645
  %v648 = vmul.f32 %v639, %v645
  %v649 = vmul.f32 %v640, %v645
  %v650 = vmul.f32 %v641, %v645
  %v651 = vld [vmem:[%s4] sm:$0xff]
  %653 = vset.pattern.permute.xlu0 0
  %654 = vperm.xlu0 %653, %v651
  %v655 = vpop.permute.xlu0 %654
  %v657 = vadd.f32 %v647, %v655
  %v658 = vadd.f32 %v648, %v655
  %v659 = vadd.f32 %v649, %v655
  %v660 = vadd.f32 %v650, %v655
  %v661 = vmax.f32 %v657, 0.0
  %v662 = vmax.f32 %v658, 0.0
  %v663 = vmax.f32 %v659, 0.0
  %v664 = vmax.f32 %v660, 0.0
  %669 = vrot.lane.b32.xlu0 %v661, 17
  %v670 = vpop.permute.xlu0 %669
  %671 = vrot.lane.b32.xlu0 %v662, 17
  %v672 = vpop.permute.xlu0 %671
  %673 = vrot.lane.b32.xlu0 %v663, 17
  %v674 = vpop.permute.xlu0 %673
  %675 = vrot.lane.b32.xlu0 %v664, 17
  %v676 = vpop.permute.xlu0 %675
  %v677 = vsel %vm54, %v670, %v672
  %v678 = vsel %vm54, %v672, %v674
  %v679 = vsel %vm54, %v674, %v676
  %v684 = vsel %vm54, 0.0, %v670
  %v685 = vld [vmem:[%s1] sm:$0xf]
  %v687 = vlaneseq
  %v688 = vshrl.u32 %v687, 7
  %v689 = vsub.s32 0, %v688
  %v690 = vrot.slane %v685, %v689
  %v691 = vlaneseq
  %v692 = vshrl.u32 %v691, 7
  %v693 = vsub.s32 1, %v692
  %v694 = vrot.slane %v685, %v693
  %v695 = vlaneseq
  %v696 = vshrl.u32 %v695, 7
  %v697 = vsub.s32 2, %v696
  %v698 = vrot.slane %v685, %v697
  %v699 = vlaneseq
  %v700 = vshrl.u32 %v699, 7
  %v701 = vsub.s32 3, %v700
  %v702 = vrot.slane %v685, %v701
  %v707 = vmul.f32 %v684, %v690
  %v708 = vmul.f32 %v677, %v694
  %v709 = vmul.f32 %v678, %v698
  %v710 = vmul.f32 %v679, %v702
  %711 = vst [vmem:[#allocation3] sm:$0xff] %v707
  %712 = vst [vmem:[#allocation3 + $0x8] sm:$0xff] %v708
  %713 = vst [vmem:[#allocation3 + $0x10] sm:$0xff] %v709
  %714 = vst [vmem:[#allocation3 + $0x18] sm:$0xff] %v710
  %715 = vrot.lane.b32.xlu0 %v661, 16
  %v716 = vpop.permute.xlu0 %715
  %717 = vrot.lane.b32.xlu0 %v662, 16
  %v718 = vpop.permute.xlu0 %717
  %719 = vrot.lane.b32.xlu0 %v663, 16
  %v720 = vpop.permute.xlu0 %719
  %721 = vrot.lane.b32.xlu0 %v664, 16
  %v722 = vpop.permute.xlu0 %721
  %v723 = vsel %vm101, %v716, %v718
  %v724 = vsel %vm101, %v718, %v720
  %v725 = vsel %vm101, %v720, %v722
  %v730 = vsel %vm101, 0.0, %v716
  %v731 = vld [vmem:[%s110] sm:$0xf]
  %v733 = vlaneseq
  %v734 = vshrl.u32 %v733, 7
  %v735 = vsub.s32 0, %v734
  %v736 = vrot.slane %v731, %v735
  %v737 = vlaneseq
  %v738 = vshrl.u32 %v737, 7
  %v739 = vsub.s32 1, %v738
  %v740 = vrot.slane %v731, %v739
  %v741 = vlaneseq
  %v742 = vshrl.u32 %v741, 7
  %v743 = vsub.s32 2, %v742
  %v744 = vrot.slane %v731, %v743
  %v745 = vlaneseq
  %v746 = vshrl.u32 %v745, 7
  %v747 = vsub.s32 3, %v746
  %v748 = vrot.slane %v731, %v747
  %v753 = vmul.f32 %v730, %v736
  %v754 = vmul.f32 %v723, %v740
  %v755 = vmul.f32 %v724, %v744
  %v756 = vmul.f32 %v725, %v748
  %757 = vst [vmem:[#allocation3 + $0x20] sm:$0xff] %v753
  %758 = vst [vmem:[#allocation3 + $0x28] sm:$0xff] %v754
  %759 = vst [vmem:[#allocation3 + $0x30] sm:$0xff] %v755
  %760 = vst [vmem:[#allocation3 + $0x38] sm:$0xff] %v756
  %761 = vrot.lane.b32.xlu0 %v661, 15
  %v762 = vpop.permute.xlu0 %761
  %763 = vrot.lane.b32.xlu0 %v662, 15
  %v764 = vpop.permute.xlu0 %763
  %765 = vrot.lane.b32.xlu0 %v663, 15
  %v766 = vpop.permute.xlu0 %765
  %767 = vrot.lane.b32.xlu0 %v664, 15
  %v768 = vpop.permute.xlu0 %767
  %v769 = vsel %vm149, %v762, %v764
  %v770 = vsel %vm149, %v764, %v766
  %v771 = vsel %vm149, %v766, %v768
  %v776 = vsel %vm149, 0.0, %v762
  %v777 = vld [vmem:[%s158] sm:$0xf]
  %v779 = vlaneseq
  %v780 = vshrl.u32 %v779, 7
  %v781 = vsub.s32 0, %v780
  %v782 = vrot.slane %v777, %v781
  %v783 = vlaneseq
  %v784 = vshrl.u32 %v783, 7
  %v785 = vsub.s32 1, %v784
  %v786 = vrot.slane %v777, %v785
  %v787 = vlaneseq
  %v788 = vshrl.u32 %v787, 7
  %v789 = vsub.s32 2, %v788
  %v790 = vrot.slane %v777, %v789
  %v791 = vlaneseq
  %v792 = vshrl.u32 %v791, 7
  %v793 = vsub.s32 3, %v792
  %v794 = vrot.slane %v777, %v793
  %v799 = vmul.f32 %v776, %v782
  %v800 = vmul.f32 %v769, %v786
  %v801 = vmul.f32 %v770, %v790
  %v802 = vmul.f32 %v771, %v794
  %803 = vst [vmem:[#allocation3 + $0x40] sm:$0xff] %v799
  %804 = vst [vmem:[#allocation3 + $0x48] sm:$0xff] %v800
  %805 = vst [vmem:[#allocation3 + $0x50] sm:$0xff] %v801
  %806 = vst [vmem:[#allocation3 + $0x58] sm:$0xff] %v802
  %807 = vrot.lane.b32.xlu0 %v661, 1
  %v808 = vpop.permute.xlu0 %807
  %809 = vrot.lane.b32.xlu0 %v662, 1
  %v810 = vpop.permute.xlu0 %809
  %811 = vrot.lane.b32.xlu0 %v663, 1
  %v812 = vpop.permute.xlu0 %811
  %813 = vrot.lane.b32.xlu0 %v664, 1
  %v814 = vpop.permute.xlu0 %813
  %v815 = vsel %vm197, %v808, %v810
  %v816 = vsel %vm197, %v810, %v812
  %v817 = vsel %vm197, %v812, %v814
  %v822 = vsel %vm197, 0.0, %v808
  %v823 = vld [vmem:[%s206] sm:$0xf]
  %v825 = vlaneseq
  %v826 = vshrl.u32 %v825, 7
  %v827 = vsub.s32 0, %v826
  %v828 = vrot.slane %v823, %v827
  %v829 = vlaneseq
  %v830 = vshrl.u32 %v829, 7
  %v831 = vsub.s32 1, %v830
  %v832 = vrot.slane %v823, %v831
  %v833 = vlaneseq
  %v834 = vshrl.u32 %v833, 7
  %v835 = vsub.s32 2, %v834
  %v836 = vrot.slane %v823, %v835
  %v837 = vlaneseq
  %v838 = vshrl.u32 %v837, 7
  %v839 = vsub.s32 3, %v838
  %v840 = vrot.slane %v823, %v839
  %v845 = vmul.f32 %v822, %v828
  %v846 = vmul.f32 %v815, %v832
  %v847 = vmul.f32 %v816, %v836
  %v848 = vmul.f32 %v817, %v840
  %849 = vst [vmem:[#allocation3 + $0x60] sm:$0xff] %v845
  %850 = vst [vmem:[#allocation3 + $0x68] sm:$0xff] %v846
  %851 = vst [vmem:[#allocation3 + $0x70] sm:$0xff] %v847
  %852 = vst [vmem:[#allocation3 + $0x78] sm:$0xff] %v848
  %v853 = vld [vmem:[%s237] sm:$0xf]
  %v855 = vlaneseq
  %v856 = vshrl.u32 %v855, 7
  %v857 = vsub.s32 0, %v856
  %v858 = vrot.slane %v853, %v857
  %v859 = vlaneseq
  %v860 = vshrl.u32 %v859, 7
  %v861 = vsub.s32 1, %v860
  %v862 = vrot.slane %v853, %v861
  %v863 = vlaneseq
  %v864 = vshrl.u32 %v863, 7
  %v865 = vsub.s32 2, %v864
  %v866 = vrot.slane %v853, %v865
  %v867 = vlaneseq
  %v868 = vshrl.u32 %v867, 7
  %v869 = vsub.s32 3, %v868
  %v870 = vrot.slane %v853, %v869
  %v875 = vmul.f32 %v661, %v858
  %v876 = vmul.f32 %v662, %v862
  %v877 = vmul.f32 %v663, %v866
  %v878 = vmul.f32 %v664, %v870
  %879 = vst [vmem:[#allocation3 + $0x80] sm:$0xff] %v875
  %880 = vst [vmem:[#allocation3 + $0x88] sm:$0xff] %v876
  %881 = vst [vmem:[#allocation3 + $0x90] sm:$0xff] %v877
  %882 = vst [vmem:[#allocation3 + $0x98] sm:$0xff] %v878
  %883 = vrot.lane.b32.xlu0 %v661, 127
  %v884 = vpop.permute.xlu0 %883
  %885 = vrot.lane.b32.xlu0 %v662, 127
  %v886 = vpop.permute.xlu0 %885
  %887 = vrot.lane.b32.xlu0 %v663, 127
  %v888 = vpop.permute.xlu0 %887
  %889 = vrot.lane.b32.xlu0 %v664, 127
  %v890 = vpop.permute.xlu0 %889
  %v891 = vsel %vm276, %v884, %v886
  %v892 = vsel %vm276, %v886, %v888
  %v893 = vsel %vm276, %v888, %v890
  %v898 = vsel %vm276, %v890, 0.0
  %v899 = vld [vmem:[%s285] sm:$0xf]
  %v901 = vlaneseq
  %v902 = vshrl.u32 %v901, 7
  %v903 = vsub.s32 0, %v902
  %v904 = vrot.slane %v899, %v903
  %v905 = vlaneseq
  %v906 = vshrl.u32 %v905, 7
  %v907 = vsub.s32 1, %v906
  %v908 = vrot.slane %v899, %v907
  %v909 = vlaneseq
  %v910 = vshrl.u32 %v909, 7
  %v911 = vsub.s32 2, %v910
  %v912 = vrot.slane %v899, %v911
  %v913 = vlaneseq
  %v914 = vshrl.u32 %v913, 7
  %v915 = vsub.s32 3, %v914
  %v916 = vrot.slane %v899, %v915
  %v921 = vmul.f32 %v891, %v904
  %v922 = vmul.f32 %v892, %v908
  %v923 = vmul.f32 %v893, %v912
  %v924 = vmul.f32 %v898, %v916
  %925 = vst [vmem:[#allocation3 + $0xa0] sm:$0xff] %v921
  %926 = vst [vmem:[#allocation3 + $0xa8] sm:$0xff] %v922
  %927 = vst [vmem:[#allocation3 + $0xb0] sm:$0xff] %v923
  %928 = vst [vmem:[#allocation3 + $0xb8] sm:$0xff] %v924
  %929 = vrot.lane.b32.xlu0 %v661, 113
  %v930 = vpop.permute.xlu0 %929
  %931 = vrot.lane.b32.xlu0 %v662, 113
  %v932 = vpop.permute.xlu0 %931
  %933 = vrot.lane.b32.xlu0 %v663, 113
  %v934 = vpop.permute.xlu0 %933
  %935 = vrot.lane.b32.xlu0 %v664, 113
  %v936 = vpop.permute.xlu0 %935
  %v937 = vsel %vm324, %v930, %v932
  %v938 = vsel %vm324, %v932, %v934
  %v939 = vsel %vm324, %v934, %v936
  %v944 = vsel %vm324, %v936, 0.0
  %v945 = vld [vmem:[%s333] sm:$0xf]
  %v947 = vlaneseq
  %v948 = vshrl.u32 %v947, 7
  %v949 = vsub.s32 0, %v948
  %v950 = vrot.slane %v945, %v949
  %v951 = vlaneseq
  %v952 = vshrl.u32 %v951, 7
  %v953 = vsub.s32 1, %v952
  %v954 = vrot.slane %v945, %v953
  %v955 = vlaneseq
  %v956 = vshrl.u32 %v955, 7
  %v957 = vsub.s32 2, %v956
  %v958 = vrot.slane %v945, %v957
  %v959 = vlaneseq
  %v960 = vshrl.u32 %v959, 7
  %v961 = vsub.s32 3, %v960
  %v962 = vrot.slane %v945, %v961
  %v967 = vmul.f32 %v937, %v950
  %v968 = vmul.f32 %v938, %v954
  %v969 = vmul.f32 %v939, %v958
  %v970 = vmul.f32 %v944, %v962
  %971 = vst [vmem:[#allocation3 + $0xc0] sm:$0xff] %v967
  %972 = vst [vmem:[#allocation3 + $0xc8] sm:$0xff] %v968
  %973 = vst [vmem:[#allocation3 + $0xd0] sm:$0xff] %v969
  %974 = vst [vmem:[#allocation3 + $0xd8] sm:$0xff] %v970
  %975 = vrot.lane.b32.xlu0 %v661, 112
  %v976 = vpop.permute.xlu0 %975
  %977 = vrot.lane.b32.xlu0 %v662, 112
  %v978 = vpop.permute.xlu0 %977
  %979 = vrot.lane.b32.xlu0 %v663, 112
  %v980 = vpop.permute.xlu0 %979
  %981 = vrot.lane.b32.xlu0 %v664, 112
  %v982 = vpop.permute.xlu0 %981
  %v983 = vsel %vm372, %v976, %v978
  %v984 = vsel %vm372, %v978, %v980
  %v985 = vsel %vm372, %v980, %v982
  %v990 = vsel %vm372, %v982, 0.0
  %v991 = vld [vmem:[%s381] sm:$0xf]
  %v993 = vlaneseq
  %v994 = vshrl.u32 %v993, 7
  %v995 = vsub.s32 0, %v994
  %v996 = vrot.slane %v991, %v995
  %v997 = vlaneseq
  %v998 = vshrl.u32 %v997, 7
  %v999 = vsub.s32 1, %v998
  %v1000 = vrot.slane %v991, %v999
  %v1001 = vlaneseq
  %v1002 = vshrl.u32 %v1001, 7
  %v1003 = vsub.s32 2, %v1002
  %v1004 = vrot.slane %v991, %v1003
  %v1005 = vlaneseq
  %v1006 = vshrl.u32 %v1005, 7
  %v1007 = vsub.s32 3, %v1006
  %v1008 = vrot.slane %v991, %v1007
  %v1013 = vmul.f32 %v983, %v996
  %v1014 = vmul.f32 %v984, %v1000
  %v1015 = vmul.f32 %v985, %v1004
  %v1016 = vmul.f32 %v990, %v1008
  %1017 = vst [vmem:[#allocation3 + $0xe0] sm:$0xff] %v1013
  %1018 = vst [vmem:[#allocation3 + $0xe8] sm:$0xff] %v1014
  %1019 = vst [vmem:[#allocation3 + $0xf0] sm:$0xff] %v1015
  %1020 = vst [vmem:[#allocation3 + $0xf8] sm:$0xff] %v1016
  %1021 = vrot.lane.b32.xlu0 %v661, 111
  %v1022 = vpop.permute.xlu0 %1021
  %1023 = vrot.lane.b32.xlu0 %v662, 111
  %v1024 = vpop.permute.xlu0 %1023
  %1025 = vrot.lane.b32.xlu0 %v663, 111
  %v1026 = vpop.permute.xlu0 %1025
  %1027 = vrot.lane.b32.xlu0 %v664, 111
  %v1028 = vpop.permute.xlu0 %1027
  %v1029 = vsel %vm420, %v1022, %v1024
  %v1030 = vsel %vm420, %v1024, %v1026
  %v1031 = vsel %vm420, %v1026, %v1028
  %v1036 = vsel %vm420, %v1028, 0.0
  %v1037 = vld [vmem:[%s429] sm:$0xf]
  %v1039 = vlaneseq
  %v1040 = vshrl.u32 %v1039, 7
  %v1041 = vsub.s32 0, %v1040
  %v1042 = vrot.slane %v1037, %v1041
  %v1043 = vlaneseq
  %v1044 = vshrl.u32 %v1043, 7
  %v1045 = vsub.s32 1, %v1044
  %v1046 = vrot.slane %v1037, %v1045
  %v1047 = vlaneseq
  %v1048 = vshrl.u32 %v1047, 7
  %v1049 = vsub.s32 2, %v1048
  %v1050 = vrot.slane %v1037, %v1049
  %v1051 = vlaneseq
  %v1052 = vshrl.u32 %v1051, 7
  %v1053 = vsub.s32 3, %v1052
  %v1054 = vrot.slane %v1037, %v1053
  %v1059 = vmul.f32 %v1029, %v1042
  %v1060 = vmul.f32 %v1030, %v1046
  %v1061 = vmul.f32 %v1031, %v1050
  %v1062 = vmul.f32 %v1036, %v1054
  %1063 = vst [vmem:[#allocation3 + $0x100] sm:$0xff] %v1059
  %1064 = vst [vmem:[#allocation3 + $0x108] sm:$0xff] %v1060
  %1065 = vst [vmem:[#allocation3 + $0x110] sm:$0xff] %v1061
  %1066 = vst [vmem:[#allocation3 + $0x118] sm:$0xff] %v1062
  %v1067 = vld [vmem:[%s5] sm:$0xf]
  %v1068 = vld [vmem:[#allocation3] sm:$0xff]
  %v1069 = vld [vmem:[#allocation3 + $0x8] sm:$0xff]
  %v1070 = vld [vmem:[#allocation3 + $0x10] sm:$0xff]
  %v1071 = vld [vmem:[#allocation3 + $0x18] sm:$0xff]
  %v1072 = vld [vmem:[#allocation3 + $0x20] sm:$0xff]
  %v1073 = vld [vmem:[#allocation3 + $0x28] sm:$0xff]
  %v1074 = vld [vmem:[#allocation3 + $0x30] sm:$0xff]
  %v1075 = vld [vmem:[#allocation3 + $0x38] sm:$0xff]
  %v1076 = vld [vmem:[#allocation3 + $0x40] sm:$0xff]
  %v1077 = vld [vmem:[#allocation3 + $0x48] sm:$0xff]
  %v1078 = vld [vmem:[#allocation3 + $0x50] sm:$0xff]
  %v1079 = vld [vmem:[#allocation3 + $0x58] sm:$0xff]
  %v1080 = vld [vmem:[#allocation3 + $0x60] sm:$0xff]
  %v1081 = vld [vmem:[#allocation3 + $0x68] sm:$0xff]
  %v1082 = vld [vmem:[#allocation3 + $0x70] sm:$0xff]
  %v1083 = vld [vmem:[#allocation3 + $0x78] sm:$0xff]
  %v1084 = vld [vmem:[#allocation3 + $0x80] sm:$0xff]
  %v1085 = vld [vmem:[#allocation3 + $0x88] sm:$0xff]
  %v1086 = vld [vmem:[#allocation3 + $0x90] sm:$0xff]
  %v1087 = vld [vmem:[#allocation3 + $0x98] sm:$0xff]
  %v1088 = vld [vmem:[#allocation3 + $0xa0] sm:$0xff]
  %v1089 = vld [vmem:[#allocation3 + $0xa8] sm:$0xff]
  %v1090 = vld [vmem:[#allocation3 + $0xb0] sm:$0xff]
  %v1091 = vld [vmem:[#allocation3 + $0xb8] sm:$0xff]
  %v1092 = vld [vmem:[#allocation3 + $0xc0] sm:$0xff]
  %v1093 = vld [vmem:[#allocation3 + $0xc8] sm:$0xff]
  %v1094 = vld [vmem:[#allocation3 + $0xd0] sm:$0xff]
  %v1095 = vld [vmem:[#allocation3 + $0xd8] sm:$0xff]
  %v1096 = vld [vmem:[#allocation3 + $0xe0] sm:$0xff]
  %v1097 = vld [vmem:[#allocation3 + $0xe8] sm:$0xff]
  %v1098 = vld [vmem:[#allocation3 + $0xf0] sm:$0xff]
  %v1099 = vld [vmem:[#allocation3 + $0xf8] sm:$0xff]
  %v1100 = vld [vmem:[#allocation3 + $0x100] sm:$0xff]
  %v1101 = vld [vmem:[#allocation3 + $0x108] sm:$0xff]
  %v1102 = vld [vmem:[#allocation3 + $0x110] sm:$0xff]
  %v1103 = vld [vmem:[#allocation3 + $0x118] sm:$0xff]
  %v1104 = vpack.c.bf16 %v1072, %v1068
  %v1105 = vpack.c.bf16 %v1073, %v1069
  %v1106 = vpack.c.bf16 %v1074, %v1070
  %v1107 = vpack.c.bf16 %v1075, %v1071
  %v1108 = vpack.c.bf16 %v1080, %v1076
  %v1109 = vpack.c.bf16 %v1081, %v1077
  %v1110 = vpack.c.bf16 %v1082, %v1078
  %v1111 = vpack.c.bf16 %v1083, %v1079
  %v1112 = vpack.c.bf16 %v1088, %v1084
  %v1113 = vpack.c.bf16 %v1089, %v1085
  %v1114 = vpack.c.bf16 %v1090, %v1086
  %v1115 = vpack.c.bf16 %v1091, %v1087
  %v1116 = vpack.c.bf16 %v1096, %v1092
  %v1117 = vpack.c.bf16 %v1097, %v1093
  %v1118 = vpack.c.bf16 %v1098, %v1094
  %v1119 = vpack.c.bf16 %v1099, %v1095
  %v1120 = vpack.c.bf16 %v1100, %v1100
  %v1121 = vpack.c.bf16 %v1101, %v1101
  %v1122 = vpack.c.bf16 %v1102, %v1102
  %v1123 = vpack.c.bf16 %v1103, %v1103
  %v1125 = vsel %vm517, %v1067, 0
  %v1128 = vsel %vm521, %v1120, 0
  %v1131 = vsel %vm521, %v1121, 0
  %v1134 = vsel %vm521, %v1122, 0
  %v1137 = vsel %vm521, %v1123, 0
  %1139 = vmatprep.subr.bf16.mxu0 %v1105
  %1140 = vmatpush1.bf16.msra.mxu0 %v1104
  %1141 = vmatprep.subr.bf16.mxu0 %v1109
  %1142 = vmatpush1.bf16.msra.mxu0 %v1108
  %1143 = vmatprep.subr.bf16.mxu0 %v1113
  %1144 = vmatpush1.bf16.msra.mxu0 %v1112
  %1145 = vmatprep.subr.bf16.mxu0 %v1117
  %1146 = vmatpush1.bf16.msra.mxu0 %v1116
  %1147 = vmatprep.subr.bf16.mxu0 %v1131
  %1148 = vmatpush1.bf16.msra.mxu0 %v1128
  %1149 = vmatprep.subr.bf16.mxu0 0
  %1150 = vmatpush1.bf16.msra.mxu0 0
  %1151 = vmatprep.subr.bf16.mxu0 0
  %1152 = vmatpush1.bf16.msra.mxu0 0
  %1153 = vmatprep.subr.bf16.mxu0 0
  %1154 = vmatpush1.bf16.msra.mxu0 0
  %1155 = vmatprep.subr.bf16.mxu0 0
  %1156 = vmatpush1.bf16.msra.mxu0 0
  %1157 = vmatprep.subr.bf16.mxu0 0
  %1158 = vmatpush1.bf16.msra.mxu0 0
  %1159 = vmatprep.subr.bf16.mxu0 0
  %1160 = vmatpush1.bf16.msra.mxu0 0
  %1161 = vmatprep.subr.bf16.mxu0 0
  %1162 = vmatpush1.bf16.msra.mxu0 0
  %1163 = vmatprep.subr.bf16.mxu0 0
  %1164 = vmatpush1.bf16.msra.mxu0 0
  %1165 = vmatprep.subr.bf16.mxu0 0
  %1166 = vmatpush1.bf16.msra.mxu0 0
  %1167 = vmatprep.subr.bf16.mxu0 0
  %1168 = vmatpush1.bf16.msra.mxu0 0
  %1169 = vmatprep.subr.bf16.mxu0 0
  %1170 = vmatpush1.bf16.msra.mxu0 0
  %1171 = vmatprep.mubr.bf16.mxu0 0
  %1172 = vmatmul.mubr.bf16.gmra.mrb[0].mxu0 %v1125
  %v1173 = vpop.f32.mrb[0].mxu0
  %v1174 = vadd.f32 0.0, %v1173
  %v1175 = vpop.f32.mrb[0].mxu0
  %v1176 = vadd.f32 0.0, %v1175
  %v1177 = vpop.f32.mrb[0].mxu0
  %v1178 = vpop.f32.mrb[0].mxu0
  %1179 = vdwg.mxu0
  %1180 = vmatprep.subr.bf16.mxu0 %v1107
  %1181 = vmatpush1.bf16.msra.mxu0 %v1106
  %1182 = vmatprep.subr.bf16.mxu0 %v1111
  %1183 = vmatpush1.bf16.msra.mxu0 %v1110
  %1184 = vmatprep.subr.bf16.mxu0 %v1115
  %1185 = vmatpush1.bf16.msra.mxu0 %v1114
  %1186 = vmatprep.subr.bf16.mxu0 %v1119
  %1187 = vmatpush1.bf16.msra.mxu0 %v1118
  %1188 = vmatprep.subr.bf16.mxu0 %v1137
  %1189 = vmatpush1.bf16.msra.mxu0 %v1134
  %1190 = vmatprep.subr.bf16.mxu0 0
  %1191 = vmatpush1.bf16.msra.mxu0 0
  %1192 = vmatprep.subr.bf16.mxu0 0
  %1193 = vmatpush1.bf16.msra.mxu0 0
  %1194 = vmatprep.subr.bf16.mxu0 0
  %1195 = vmatpush1.bf16.msra.mxu0 0
  %1196 = vmatprep.subr.bf16.mxu0 0
  %1197 = vmatpush1.bf16.msra.mxu0 0
  %1198 = vmatprep.subr.bf16.mxu0 0
  %1199 = vmatpush1.bf16.msra.mxu0 0
  %1200 = vmatprep.subr.bf16.mxu0 0
  %1201 = vmatpush1.bf16.msra.mxu0 0
  %1202 = vmatprep.subr.bf16.mxu0 0
  %1203 = vmatpush1.bf16.msra.mxu0 0
  %1204 = vmatprep.subr.bf16.mxu0 0
  %1205 = vmatpush1.bf16.msra.mxu0 0
  %1206 = vmatprep.subr.bf16.mxu0 0
  %1207 = vmatpush1.bf16.msra.mxu0 0
  %1208 = vmatprep.subr.bf16.mxu0 0
  %1209 = vmatpush1.bf16.msra.mxu0 0
  %1210 = vmatprep.subr.bf16.mxu0 0
  %1211 = vmatpush1.bf16.msra.mxu0 0
  %1212 = vmatprep.mubr.bf16.mxu0 0
  %1213 = vmatmul.mubr.bf16.gmra.mrb[0].mxu0 %v1125
  %v1214 = vpop.f32.mrb[0].mxu0
  %v1215 = vadd.f32 0.0, %v1214
  %v1216 = vpop.f32.mrb[0].mxu0
  %v1217 = vadd.f32 0.0, %v1216
  %v1218 = vpop.f32.mrb[0].mxu0
  %v1219 = vpop.f32.mrb[0].mxu0
  %1220 = vdwg.mxu0
  %v1221 = vadd.f32 %v1174, %v1176
  %v1222 = vadd.f32 %v1221, %v1215
  %v1223 = vadd.f32 %v1222, %v1217
  %1224 = vadd.xlane.f32.xlu0 %v1223
  %v1225 = vpop.xlane.xlu0 %1224
  %v1226 = vmul.f32 %v1174, %v1174
  %v1227 = vmul.f32 %v1176, %v1176
  %v1228 = vmul.f32 %v1215, %v1215
  %v1229 = vmul.f32 %v1217, %v1217
  %v1230 = vadd.f32 %v1226, %v1227
  %v1231 = vadd.f32 %v1230, %v1228
  %v1232 = vadd.f32 %v1231, %v1229
  %1233 = vadd.xlane.f32.xlu0 %v1232
  %v1234 = vpop.xlane.xlu0 %1233
  %v1235 = vmul.f32 %v1225, 0.001953125
  %v1236 = vmul.f32 %v1234, 0.001953125
  %v1237 = vmul.f32 %v1235, %v1235
  %v1238 = vsub.f32 %v1236, %v1237
  %v1239 = vadd.f32 %v1238, 1e-05
  %v1240 = vrsqrt.pop %v1239
  %v1241 = vld [vmem:[%s6] sm:$0xff]
  %v1242 = vmul.f32 %v1240, %v1241
  %v1243 = vsub.f32 %v1174, %v1235
  %v1244 = vsub.f32 %v1176, %v1235
  %v1245 = vsub.f32 %v1215, %v1235
  %v1246 = vsub.f32 %v1217, %v1235
  %1248 = vset.pattern.permute.xlu0 0
  %1249 = vperm.xlu0 %1248, %v1242
  %v1250 = vpop.permute.xlu0 %1249
  %v1252 = vmul.f32 %v1243, %v1250
  %v1253 = vmul.f32 %v1244, %v1250
  %v1254 = vmul.f32 %v1245, %v1250
  %v1255 = vmul.f32 %v1246, %v1250
  %v1256 = vld [vmem:[%s7] sm:$0xff]
  %1258 = vset.pattern.permute.xlu0 0
  %1259 = vperm.xlu0 %1258, %v1256
  %v1260 = vpop.permute.xlu0 %1259
  %v1262 = vadd.f32 %v1252, %v1260
  %v1263 = vadd.f32 %v1253, %v1260
  %v1264 = vadd.f32 %v1254, %v1260
  %v1265 = vadd.f32 %v1255, %v1260
  %v1266 = vld [vmem:[#allocation2] sm:$0xff]
  %v1267 = vld [vmem:[#allocation2 + $0x8] sm:$0xff]
  %v1268 = vld [vmem:[#allocation2 + $0x10] sm:$0xff]
  %v1269 = vld [vmem:[#allocation2 + $0x18] sm:$0xff]
  %v1270 = vadd.f32 %v1262, %v1266
  %v1271 = vadd.f32 %v1263, %v1267
  %v1272 = vadd.f32 %v1264, %v1268
  %v1273 = vadd.f32 %v1265, %v1269
  %v1274 = vmax.f32 %v1270, 0.0
  %v1275 = vmax.f32 %v1271, 0.0
  %v1276 = vmax.f32 %v1272, 0.0
  %v1277 = vmax.f32 %v1273, 0.0
  %1278 = vst [vmem:[%s8] sm:$0xff] %v1274
  %1279 = vst [vmem:[%s8 + $0x8] sm:$0xff] %v1275
  %1280 = vst [vmem:[%s8 + $0x10] sm:$0xff] %v1276
  %1281 = vst [vmem:[%s8 + $0x18] sm:$0xff] %v1277
  // Predicated region
  $region34: #{basic_block.1} parent=0 // pred_check
    _
  $region35: #{basic_block.1} parent=0 // pred_check_branch
    %1283 = sbr.rel (0) target = $region37
  $region36: #{basic_block.1} parent=0 // pred_region
    _
  $region37: #{basic_block.1} parent=0 // pred_fallthru
    _
  // Predicated region
  $region38: #{basic_block.1} parent=0 // pred_check
    _
  $region39: #{basic_block.1} parent=0 // pred_check_branch
    %1285 = sbr.rel (0) target = $region41
  $region40: #{basic_block.1} parent=0 // pred_region
    _
  $region41: #{basic_block.1} parent=0 // pred_fallthru
    _

</llo_original>
